<compile_context>
chip_gen: v6e
topology: v6e:2x2x1
jax: 0.10.0
libtpu: 0.0.40
codegen_flags: <defaults>
</compile_context>

<pallas_src>
import functools
import math

import jax
import jax.numpy as jnp
from jax.experimental import pallas as pl
from jax.experimental.pallas import tpu as pltpu


def _sdpa_kernel(q_ref, k_ref, v_ref, mask_ref, ctx_ref, attn_ref, *, scale):
    # Each ref holds G heads for this grid step:
    #   q: (G, Lq, Dk)  k: (G, Lk, Dk)  v: (G, Lk, Dv)  mask: (G, Lq, Lk) int8
    q = q_ref[...] * scale          # fold 1/sqrt(d_k) into Q (smaller tile than scores)
    k = k_ref[...]
    v = v_ref[...]
    # Single cheap i8->f32 unpack; everything downstream is plain f32 VPU ops.
    m = mask_ref[...].astype(jnp.float32)

    # scores = Q @ K^T : contract last axes of both operands directly
    # (batched dot_general; no transpose / relayout of K).
    scores = jnp.einsum(
        "gqd,gkd->gqk", q, k, preferred_element_type=jnp.float32
    )  # (G, Lq, Lk) f32

    # masked_fill_(attn_mask, -1e9)  (nonzero == masked out)
    scores = jnp.where(m != 0.0, jnp.float32(-1e9), scores)

    # Numerically stable softmax along the last axis.
    row_max = jnp.max(scores, axis=-1, keepdims=True)
    p = jnp.exp(scores - row_max)
    denom = jnp.sum(p, axis=-1, keepdims=True)
    inv = pl.reciprocal(denom, approx=True)          # EUP vrcp (free slot)
    inv = inv * (2.0 - denom * inv)                  # one Newton step -> ~f32 exact
    attn = p * inv                                   # (G, Lq, Lk) f32

    # context = attn @ V  (probs in V's dtype -> bf16 MXU path for bf16 inputs,
    # accumulation stays f32).
    ctx = jnp.einsum(
        "gqk,gkd->gqd", attn.astype(v.dtype), v, preferred_element_type=jnp.float32
    )  # (G, Lq, Dv) f32

    attn_ref[...] = attn.astype(attn_ref.dtype)
    ctx_ref[...] = ctx.astype(ctx_ref.dtype)


def scaled_dot_product_attention(Q, K, V, attn_mask, *, heads_per_block=None):
    """Q:[B,H,Lq,Dk] K:[B,H,Lk,Dk] V:[B,H,Lk,Dv] attn_mask:[B,H,Lq,Lk] (bool/int,
    nonzero == masked out).

    Returns (context [B,H,Lq,Dv], attn [B,H,Lq,Lk]) -- same as the PyTorch module.
    """
    B, H, Lq, Dk = Q.shape
    Lk = K.shape[2]
    Dv = V.shape[-1]
    BH = B * H
    scale = 1.0 / math.sqrt(Dk)
    itemsize = jnp.dtype(Q.dtype).itemsize

    # Fuse batch and head into a single axis (free reshape: leading dims only).
    Qf = Q.reshape(BH, Lq, Dk)
    Kf = K.reshape(BH, Lk, Dk)
    Vf = V.reshape(BH, Lk, Dv)
    Mf = attn_mask.astype(jnp.int8).reshape(BH, Lq, Lk)   # int8 mask: 4x less DMA

    # Pack G heads per grid step: amortize per-step overhead and present
    # ~>=256 LHS rows to the MXU; cap the footprint so the double-buffered
    # pipeline stays well inside scoped VMEM even on v7x (64 MiB total).
    def _step_bytes(g):
        in_b = g * (Lq * Dk + Lk * Dk + Lk * Dv) * itemsize + g * Lq * Lk
        out_b = g * (Lq * Dv + Lq * Lk) * itemsize
        return 2 * (in_b + out_b)  # x2 for double buffering

    if heads_per_block is None:
        G = max(1, min(BH, -(-256 // Lq)))  # ceil(256 / Lq), capped at BH
    else:
        G = max(1, min(BH, heads_per_block))
    while G > 1 and (BH % G != 0 or _step_bytes(G) > 8 * 1024 * 1024):
        G -= 1

    grid = (BH // G,)
    idx = lambda i: (i, 0, 0)

    kernel = functools.partial(_sdpa_kernel, scale=scale)

    ctx, attn = pl.pallas_call(
        kernel,
        out_shape=(
            jax.ShapeDtypeStruct((BH, Lq, Dv), Q.dtype),
            jax.ShapeDtypeStruct((BH, Lq, Lk), Q.dtype),
        ),
        grid_spec=pltpu.PrefetchScalarGridSpec(
            num_scalar_prefetch=0,
            grid=grid,
            in_specs=[
                pl.BlockSpec((G, Lq, Dk), idx),
                pl.BlockSpec((G, Lk, Dk), idx),
                pl.BlockSpec((G, Lk, Dv), idx),
                pl.BlockSpec((G, Lq, Lk), idx),
            ],
            out_specs=[
                pl.BlockSpec((G, Lq, Dv), idx),
                pl.BlockSpec((G, Lq, Lk), idx),
            ],
        ),
        compiler_params=pltpu.CompilerParams(
            dimension_semantics=("parallel",),
        ),
    )(Qf, Kf, Vf, Mf)

    return ctx.reshape(B, H, Lq, Dv), attn.reshape(B, H, Lq, Lk)


def _reference(Q, K, V, attn_mask):
    scale = 1.0 / math.sqrt(Q.shape[-1])
    scores = jnp.einsum("bhqd,bhkd->bhqk", Q, K) * scale
    scores = jnp.where(attn_mask, -1e9, scores)
    attn = jax.nn.softmax(scores, axis=-1)
    ctx = jnp.einsum("bhqk,bhkd->bhqd", attn, V)
    return ctx, attn


if __name__ == "__main__":
    key = jax.random.PRNGKey(0)
    B, H, Lq, Lk, Dk, Dv = 2, 4, 8, 8, 32, 32

    kq, kk, kv, km = jax.random.split(key, 4)
    Q = jax.random.normal(kq, (B, H, Lq, Dk), dtype=jnp.float32)
    K = jax.random.normal(kk, (B, H, Lk, Dk), dtype=jnp.float32)
    V = jax.random.normal(kv, (B, H, Lk, Dv), dtype=jnp.float32)
    # boolean mask: True == masked out (same convention as masked_fill_)
    attn_mask = jax.random.bernoulli(km, 0.25, (B, H, Lq, Lk))

    ctx, attn = scaled_dot_product_attention(Q, K, V, attn_mask)
    ctx = jax.block_until_ready(ctx)
    attn = jax.block_until_ready(attn)

    ctx_ref, attn_ref = _reference(Q, K, V, attn_mask)
    assert jnp.allclose(ctx, ctx_ref, atol=1e-4, rtol=1e-4), "context mismatch"
    assert jnp.allclose(attn, attn_ref, atol=2e-5, rtol=1e-4), "attn mismatch"

    print("KERNEL_OK")
</pallas_src>

<mosaic_0001>
module attributes {stable_mosaic.version = 11 : i64} {
  func.func @_sdpa_kernel(%arg0: i32, %arg1: memref<8x8x32xf32, #tpu.memory_space<vmem>>, %arg2: memref<8x8x32xf32, #tpu.memory_space<vmem>>, %arg3: memref<8x8x32xf32, #tpu.memory_space<vmem>>, %arg4: memref<8x8x8xi8, #tpu.memory_space<vmem>>, %arg5: memref<8x8x32xf32, #tpu.memory_space<vmem>>, %arg6: memref<8x8x8xf32, #tpu.memory_space<vmem>>) attributes {dimension_semantics = [#tpu.dimension_semantics<parallel>], iteration_bounds = array<i64: 1>, scalar_prefetch = 0 : i64, scratch_operands = 0 : i64, tpu.core_type = #tpu.core_type<tc>, window_params = [{transform_indices = @transform_0, window_bounds = array<i64: 8, 8, 32>}, {transform_indices = @transform_1, window_bounds = array<i64: 8, 8, 32>}, {transform_indices = @transform_2, window_bounds = array<i64: 8, 8, 32>}, {transform_indices = @transform_3, window_bounds = array<i64: 8, 8, 8>}, {transform_indices = @transform_4, window_bounds = array<i64: 8, 8, 32>}, {transform_indices = @transform_5, window_bounds = array<i64: 8, 8, 8>}]} {
    %c0 = arith.constant 0 : index
    %c0_0 = arith.constant 0 : index
    %c0_1 = arith.constant 0 : index
    %0 = vector.load %arg1[%c0, %c0_0, %c0_1] : memref<8x8x32xf32, #tpu.memory_space<vmem>>, vector<8x8x32xf32>
    %cst = arith.constant 0.176776692 : f32
    %1 = vector.broadcast %cst : f32 to vector<8x8x32xf32>
    %2 = arith.mulf %0, %1 : vector<8x8x32xf32>
    %c0_2 = arith.constant 0 : index
    %c0_3 = arith.constant 0 : index
    %c0_4 = arith.constant 0 : index
    %3 = vector.load %arg2[%c0_2, %c0_3, %c0_4] : memref<8x8x32xf32, #tpu.memory_space<vmem>>, vector<8x8x32xf32>
    %c0_5 = arith.constant 0 : index
    %c0_6 = arith.constant 0 : index
    %c0_7 = arith.constant 0 : index
    %4 = vector.load %arg3[%c0_5, %c0_6, %c0_7] : memref<8x8x32xf32, #tpu.memory_space<vmem>>, vector<8x8x32xf32>
    %c0_8 = arith.constant 0 : index
    %c0_9 = arith.constant 0 : index
    %c0_10 = arith.constant 0 : index
    %5 = vector.load %arg4[%c0_8, %c0_9, %c0_10] : memref<8x8x8xi8, #tpu.memory_space<vmem>>, vector<8x8x8xi8>
    %6 = arith.sitofp %5 : vector<8x8x8xi8> to vector<8x8x8xf32>
    "tpu.trace_start"() <{level = 10 : i32, message = "gqd,gkd->gqk"}> : () -> ()
    %cst_11 = arith.constant dense<0.000000e+00> : vector<8x8x8xf32>
    %7 = tpu.matmul %2, %3, %cst_11 {dimension_numbers = #tpu.dot_dimension_numbers<[2], [2], [1], [1], [0, 0, 0, 1, 1, 1], [0], [0]>} : vector<8x8x32xf32>, vector<8x8x32xf32>, vector<8x8x8xf32> -> vector<8x8x8xf32>
    %cst_12 = arith.constant 0.000000e+00 : f32
    "tpu.trace_stop"() : () -> ()
    %8 = vector.broadcast %cst_12 : f32 to vector<8x8x8xf32>
    %9 = arith.cmpf one, %6, %8 : vector<8x8x8xf32>
    %cst_13 = arith.constant -1.000000e+09 : f32
    %10 = vector.broadcast %cst_13 : f32 to vector<8x8x8xf32>
    %11 = arith.select %9, %10, %7 : vector<8x8x8xi1>, vector<8x8x8xf32>
    %cst_14 = arith.constant dense<0xFF800000> : vector<8x8xf32>
    %12 = vector.multi_reduction <maximumf>, %11, %cst_14 [2] : vector<8x8x8xf32> to vector<8x8xf32>
    %13 = vector.shape_cast %12 : vector<8x8xf32> to vector<8x8x1xf32>
    %14 = vector.broadcast %13 : vector<8x8x1xf32> to vector<8x8x8xf32>
    %15 = arith.subf %11, %14 : vector<8x8x8xf32>
    %16 = math.exp %15 : vector<8x8x8xf32>
    %cst_15 = arith.constant dense<0.000000e+00> : vector<8x8xf32>
    %17 = vector.multi_reduction <add>, %16, %cst_15 [2] : vector<8x8x8xf32> to vector<8x8xf32>
    %18 = vector.shape_cast %17 : vector<8x8xf32> to vector<8x8x1xf32>
    %19 = tpu.reciprocal %18 {approx = true} : vector<8x8x1xf32> -> vector<8x8x1xf32>
    %20 = arith.mulf %18, %19 : vector<8x8x1xf32>
    %cst_16 = arith.constant 2.000000e+00 : f32
    %21 = vector.broadcast %cst_16 : f32 to vector<8x8x1xf32>
    %22 = arith.subf %21, %20 : vector<8x8x1xf32>
    %23 = arith.mulf %19, %22 : vector<8x8x1xf32>
    %24 = vector.broadcast %23 : vector<8x8x1xf32> to vector<8x8x8xf32>
    %25 = arith.mulf %16, %24 : vector<8x8x8xf32>
    "tpu.trace_start"() <{level = 10 : i32, message = "gqk,gkd->gqd"}> : () -> ()
    %cst_17 = arith.constant dense<0.000000e+00> : vector<8x8x32xf32>
    %26 = tpu.matmul %25, %4, %cst_17 {dimension_numbers = #tpu.dot_dimension_numbers<[2], [1], [1], [2], [0, 0, 0, 1, 1, 2], [0], [0]>} : vector<8x8x8xf32>, vector<8x8x32xf32>, vector<8x8x32xf32> -> vector<8x8x32xf32>
    "tpu.trace_stop"() : () -> ()
    %c0_18 = arith.constant 0 : index
    %c0_19 = arith.constant 0 : index
    %c0_20 = arith.constant 0 : index
    %27 = vector.load %arg6[%c0_18, %c0_19, %c0_20] : memref<8x8x8xf32, #tpu.memory_space<vmem>>, vector<8x8x8xf32>
    tpu.vector_store %arg6[%c0_18, %c0_19, %c0_20], %25 {strides = array<i32>} : memref<8x8x8xf32, #tpu.memory_space<vmem>>, vector<8x8x8xf32>,
    %c0_21 = arith.constant 0 : index
    %c0_22 = arith.constant 0 : index
    %c0_23 = arith.constant 0 : index
    %28 = vector.load %arg5[%c0_21, %c0_22, %c0_23] : memref<8x8x32xf32, #tpu.memory_space<vmem>>, vector<8x8x32xf32>
    tpu.vector_store %arg5[%c0_21, %c0_22, %c0_23], %26 {strides = array<i32>} : memref<8x8x32xf32, #tpu.memory_space<vmem>>, vector<8x8x32xf32>,
    return
  }
  func.func @transform_0(%arg0: i32) -> (i32, i32, i32) {
    %c0_i32 = arith.constant 0 : i32
    %c0_i32_0 = arith.constant 0 : i32
    %c0_i32_1 = arith.constant 0 : i32
    return %arg0, %c0_i32, %c0_i32_0 : i32, i32, i32
  }
  func.func @transform_1(%arg0: i32) -> (i32, i32, i32) {
    %c0_i32 = arith.constant 0 : i32
    %c0_i32_0 = arith.constant 0 : i32
    %c0_i32_1 = arith.constant 0 : i32
    return %arg0, %c0_i32, %c0_i32_0 : i32, i32, i32
  }
  func.func @transform_2(%arg0: i32) -> (i32, i32, i32) {
    %c0_i32 = arith.constant 0 : i32
    %c0_i32_0 = arith.constant 0 : i32
    %c0_i32_1 = arith.constant 0 : i32
    return %arg0, %c0_i32, %c0_i32_0 : i32, i32, i32
  }
  func.func @transform_3(%arg0: i32) -> (i32, i32, i32) {
    %c0_i32 = arith.constant 0 : i32
    %c0_i32_0 = arith.constant 0 : i32
    %c0_i32_1 = arith.constant 0 : i32
    return %arg0, %c0_i32, %c0_i32_0 : i32, i32, i32
  }
  func.func @transform_4(%arg0: i32) -> (i32, i32, i32) {
    %c0_i32 = arith.constant 0 : i32
    %c0_i32_0 = arith.constant 0 : i32
    %c0_i32_1 = arith.constant 0 : i32
    return %arg0, %c0_i32, %c0_i32_0 : i32, i32, i32
  }
  func.func @transform_5(%arg0: i32) -> (i32, i32, i32) {
    %c0_i32 = arith.constant 0 : i32
    %c0_i32_0 = arith.constant 0 : i32
    %c0_i32_1 = arith.constant 0 : i32
    return %arg0, %c0_i32, %c0_i32_0 : i32, i32, i32
  }
}

</mosaic_0001>

<llo_original>
// kernel: tpu_custom_call.1
$region0: #{tpu_custom_call.1}
  #allocation0 [shape = 'u32[]', space=smem, size = 0x4, offset = 0x4, fixed_abs, tag = 'smem constant byte address 0x4 - core index']
  #allocation1 [shape = 'u32[144,128]{1,0:T(1,128)}', space=vmem, size = 0x12000, scoped, tag = 'internal scratch']
  %s0 = inlined_call_operand.hbm [shape: f32[8,8,32], index: 0, kind: input, shape index: {}]
  %s1 = inlined_call_operand.hbm [shape: f32[8,8,32], index: 1, kind: input, shape index: {}]
  %s2 = inlined_call_operand.hbm [shape: f32[8,8,32], index: 2, kind: input, shape index: {}]
  %s3 = inlined_call_operand.hbm [shape: s8[8,8,8], index: 3, kind: input, shape index: {}]
  %s4 = inlined_call_operand.hbm [shape: f32[8,8,32], index: 4, kind: output, shape index: {0}]
  %s5 = inlined_call_operand.hbm [shape: f32[8,8,8], index: 5, kind: output, shape index: {1}]
  %6 = xla_tuple %s4, %s5
  %s7 = sld [smem:[#allocation0]]
  $region50: #{tpu_custom_call.1} parent=0
    _
  %s9 = ssub.s32 1, %s7
  %s10 = scalar_select 0, %s9, %s7
  $region1: #{tpu_custom_call.1} parent=0
    #allocation2 [shape = 'u8[32768]{0}', space=vmem, size = 0x8000, scoped, tag = 'input window, operand 0, single buffered']
    #allocation3 [shape = 's32[1]{0}', space=sflag, size = 0x4, scoped, tag = 'scoped memory for tpu_custom_call.1']
    #allocation4 [shape = 's32[1]{0}', space=sflag, size = 0x4, scoped, tag = 'scoped memory for tpu_custom_call.1']
    #allocation5 [shape = 'u8[32768]{0}', space=vmem, size = 0x8000, scoped, tag = 'input window, operand 1, single buffered']
    #allocation6 [shape = 's32[1]{0}', space=sflag, size = 0x4, scoped, tag = 'scoped memory for tpu_custom_call.1']
    #allocation7 [shape = 'u8[32768]{0}', space=vmem, size = 0x8000, scoped, tag = 'input window, operand 2, single buffered']
    #allocation8 [shape = 'u8[8192]{0}', space=vmem, size = 0x2000, scoped, tag = 'input window, operand 3, single buffered']
    #allocation9 [shape = 's32[1]{0}', space=sflag, size = 0x4, scoped, tag = 'scoped memory for tpu_custom_call.1']
    #allocation10 [shape = 'u8[32768]{0}', space=vmem, size = 0x8000, scoped, tag = 'output window, operand 0, single buffered']
    #allocation11 [shape = 'u8[32768]{0}', space=vmem, size = 0x8000, scoped, tag = 'output window, operand 1, single buffered']
    #allocation12 [shape = 's32[1]{0}', space=sflag, size = 0x4, scoped, tag = 'scoped memory for tpu_custom_call.1']
    %11 = vsyncpa [#allocation3], 0
    %12 = vsyncpa [#allocation6], 0
    %13 = vsyncpa [#allocation9], 0
    %14 = vsyncpa [#allocation4], 0
    %15 = vsyncpa [#allocation12], 0
    // Predicated region
    $region2: #{tpu_custom_call.1} parent=1 // pred_check
      _
    $region3: #{tpu_custom_call.1} parent=1 // pred_check_branch
      %17 = sbr.rel (0) target = $region5
    $region4: #{tpu_custom_call.1} parent=1 // pred_region
      %s19 = ssub.s32 1024, 1024
      %20 = vsyncadd [#allocation3], %s19
      %s21 = sshll.u32 [#allocation2], 4
      %s22 = int_to_ptr.vmem [resolvable:$true] %s21
      %27 = dma.hbm_to_vmem [thread:$0]  %s0, 1024, %s22, [#allocation3], 128, 128, 8
    $region5: #{tpu_custom_call.1} parent=1 // pred_fallthru
      _
    // Predicated region
    $region6: #{tpu_custom_call.1} parent=1 // pred_check
      _
    $region7: #{tpu_custom_call.1} parent=1 // pred_check_branch
      %29 = sbr.rel (0) target = $region9
    $region8: #{tpu_custom_call.1} parent=1 // pred_region
      %s31 = ssub.s32 1024, 1024
      %32 = vsyncadd [#allocation6], %s31
      %s33 = sshll.u32 [#allocation5], 4
      %s34 = int_to_ptr.vmem [resolvable:$true] %s33
      %39 = dma.hbm_to_vmem [thread:$0]  %s1, 1024, %s34, [#allocation6], 128, 128, 8
    $region9: #{tpu_custom_call.1} parent=1 // pred_fallthru
      _
    // Predicated region
    $region10: #{tpu_custom_call.1} parent=1 // pred_check
      _
    $region11: #{tpu_custom_call.1} parent=1 // pred_check_branch
      %41 = sbr.rel (0) target = $region13
    $region12: #{tpu_custom_call.1} parent=1 // pred_region
      %s43 = ssub.s32 1024, 1024
      %44 = vsyncadd [#allocation6], %s43
      %s45 = sshll.u32 [#allocation7], 4
      %s46 = int_to_ptr.vmem [resolvable:$true] %s45
      %51 = dma.hbm_to_vmem [thread:$0]  %s2, 1024, %s46, [#allocation6], 128, 128, 8
    $region13: #{tpu_custom_call.1} parent=1 // pred_fallthru
      _
    // Predicated region
    $region14: #{tpu_custom_call.1} parent=1 // pred_check
      _
    $region15: #{tpu_custom_call.1} parent=1 // pred_check_branch
      %53 = sbr.rel (0) target = $region17
    $region16: #{tpu_custom_call.1} parent=1 // pred_region
      %s55 = ssub.s32 256, 256
      %56 = vsyncadd [#allocation9], %s55
      %s57 = sshll.u32 [#allocation8], 4
      %s58 = int_to_ptr.vmem [resolvable:$true] %s57
      %63 = dma.hbm_to_vmem [thread:$0]  %s3, 256, %s58, [#allocation9], 32, 32, 2
    $region17: #{tpu_custom_call.1} parent=1 // pred_fallthru
      _
    // Predicated region
    $region18: #{tpu_custom_call.1} parent=1 // pred_check
      _
    $region19: #{tpu_custom_call.1} parent=1 // pred_check_branch
      %65 = sbr.rel (0) target = $region21
    $region20: #{tpu_custom_call.1} parent=1 // pred_region
      %66 = dma.done [#allocation3], 1024
    $region21: #{tpu_custom_call.1} parent=1 // pred_fallthru
      _
    // Predicated region
    $region22: #{tpu_custom_call.1} parent=1 // pred_check
      _
    $region23: #{tpu_custom_call.1} parent=1 // pred_check_branch
      %68 = sbr.rel (0) target = $region25
    $region24: #{tpu_custom_call.1} parent=1 // pred_region
      %69 = dma.done [#allocation6], 1024
    $region25: #{tpu_custom_call.1} parent=1 // pred_fallthru
      _
    // Predicated region
    $region26: #{tpu_custom_call.1} parent=1 // pred_check
      _
    $region27: #{tpu_custom_call.1} parent=1 // pred_check_branch
      %71 = sbr.rel (0) target = $region29
    $region28: #{tpu_custom_call.1} parent=1 // pred_region
      %72 = dma.done [#allocation6], 1024
    $region29: #{tpu_custom_call.1} parent=1 // pred_fallthru
      _
    // Predicated region
    $region30: #{tpu_custom_call.1} parent=1 // pred_check
      _
    $region31: #{tpu_custom_call.1} parent=1 // pred_check_branch
      %74 = sbr.rel (0) target = $region33
    $region32: #{tpu_custom_call.1} parent=1 // pred_region
      %75 = dma.done [#allocation9], 256
    $region33: #{tpu_custom_call.1} parent=1 // pred_fallthru
      _
    %v76 = vld [vmem:[#allocation2] sm:$0xff]
    %v77 = vld [vmem:[#allocation2 + $0x8] sm:$0xff]
    %v78 = vld [vmem:[#allocation2 + $0x10] sm:$0xff]
    %v79 = vld [vmem:[#allocation2 + $0x18] sm:$0xff]
    %v80 = vld [vmem:[#allocation2 + $0x20] sm:$0xff]
    %v81 = vld [vmem:[#allocation2 + $0x28] sm:$0xff]
    %v82 = vld [vmem:[#allocation2 + $0x30] sm:$0xff]
    %v83 = vld [vmem:[#allocation2 + $0x38] sm:$0xff]
    %v84 = vmul.f32 %v76, 0.17677669
    %v85 = vmul.f32 %v77, 0.17677669
    %v86 = vmul.f32 %v78, 0.17677669
    %v87 = vmul.f32 %v79, 0.17677669
    %v88 = vmul.f32 %v80, 0.17677669
    %v89 = vmul.f32 %v81, 0.17677669
    %v90 = vmul.f32 %v82, 0.17677669
    %v91 = vmul.f32 %v83, 0.17677669
    %v92 = vld [vmem:[#allocation5] sm:$0xff]
    %v93 = vld [vmem:[#allocation5 + $0x8] sm:$0xff]
    %v94 = vld [vmem:[#allocation5 + $0x10] sm:$0xff]
    %v95 = vld [vmem:[#allocation5 + $0x18] sm:$0xff]
    %v96 = vld [vmem:[#allocation5 + $0x20] sm:$0xff]
    %v97 = vld [vmem:[#allocation5 + $0x28] sm:$0xff]
    %v98 = vld [vmem:[#allocation5 + $0x30] sm:$0xff]
    %v99 = vld [vmem:[#allocation5 + $0x38] sm:$0xff]
    %v100 = vld [vmem:[#allocation7] sm:$0xff]
    %v101 = vld [vmem:[#allocation7 + $0x8] sm:$0xff]
    %v102 = vld [vmem:[#allocation7 + $0x10] sm:$0xff]
    %v103 = vld [vmem:[#allocation7 + $0x18] sm:$0xff]
    %v104 = vld [vmem:[#allocation7 + $0x20] sm:$0xff]
    %v105 = vld [vmem:[#allocation7 + $0x28] sm:$0xff]
    %v106 = vld [vmem:[#allocation7 + $0x30] sm:$0xff]
    %v107 = vld [vmem:[#allocation7 + $0x38] sm:$0xff]
    %v108 = vld [vmem:[#allocation8] sm:$0x3]
    %v109 = vld [vmem:[#allocation8 + $0x2] sm:$0x3]
    %v110 = vld [vmem:[#allocation8 + $0x4] sm:$0x3]
    %v111 = vld [vmem:[#allocation8 + $0x6] sm:$0x3]
    %v112 = vld [vmem:[#allocation8 + $0x8] sm:$0x3]
    %v113 = vld [vmem:[#allocation8 + $0xa] sm:$0x3]
    %v114 = vld [vmem:[#allocation8 + $0xc] sm:$0x3]
    %v115 = vld [vmem:[#allocation8 + $0xe] sm:$0x3]
    %v116 = vunpack.c.0.s8 %v108
    %v117 = vunpack.c.0.s8 %v109
    %v118 = vunpack.c.0.s8 %v110
    %v119 = vunpack.c.0.s8 %v111
    %v120 = vunpack.c.0.s8 %v112
    %v121 = vunpack.c.0.s8 %v113
    %v122 = vunpack.c.0.s8 %v114
    %v123 = vunpack.c.0.s8 %v115
    %v124 = vcvt.s32.f32 %v116
    %v125 = vcvt.s32.f32 %v117
    %v126 = vcvt.s32.f32 %v118
    %v127 = vcvt.s32.f32 %v119
    %v128 = vcvt.s32.f32 %v120
    %v129 = vcvt.s32.f32 %v121
    %v130 = vcvt.s32.f32 %v122
    %v131 = vcvt.s32.f32 %v123
    %vm132 = vcmask 261120
    %v134 = vsel %vm132, %v84, 0
    %v137 = vsel %vm132, %v92, 0
    %139 = vmatprep.subr.mxu0 0.0
    %140 = vmatpush1.xpose.msra.mxu0 0.0
    %141 = vmatprep.subr.mxu0 0.0
    %142 = vmatpush1.xpose.msra.mxu0 0.0
    %143 = vmatprep.subr.mxu0 0.0
    %144 = vmatpush1.xpose.msra.mxu0 0.0
    %145 = vmatprep.subr.mxu0 0.0
    %146 = vmatpush1.xpose.msra.mxu0 0.0
    %147 = vmatprep.subr.mxu0 0.0
    %148 = vmatpush1.xpose.msra.mxu0 0.0
    %149 = vmatprep.subr.mxu0 0.0
    %150 = vmatpush1.xpose.msra.mxu0 0.0
    %151 = vmatprep.subr.mxu0 0.0
    %152 = vmatpush1.xpose.msra.mxu0 0.0
    %153 = vmatprep.subr.mxu0 0.0
    %154 = vmatpush1.xpose.msra.mxu0 0.0
    %155 = vmatprep.subr.mxu0 0.0
    %156 = vmatpush1.xpose.msra.mxu0 0.0
    %157 = vmatprep.subr.mxu0 0.0
    %158 = vmatpush1.xpose.msra.mxu0 0.0
    %159 = vmatprep.subr.mxu0 0.0
    %160 = vmatpush1.xpose.msra.mxu0 0.0
    %161 = vmatprep.subr.mxu0 0.0
    %162 = vmatpush1.xpose.msra.mxu0 0.0
    %163 = vmatprep.subr.mxu0 0.0
    %164 = vmatpush1.xpose.msra.mxu0 0.0
    %165 = vmatprep.subr.mxu0 0.0
    %166 = vmatpush1.xpose.msra.mxu0 0.0
    %167 = vmatprep.subr.mxu0 0.0
    %168 = vmatpush1.xpose.msra.mxu0 0.0
    %169 = vmatprep.subr.mxu0 0.0
    %170 = vmatpush1.xpose.msra.mxu0 %v137
    %171 = vmatprep.subr.mxu0 0.0
    %172 = vmatpush2.xpose.msra.mxu0 0.0
    %173 = vmatprep.subr.mxu0 0.0
    %174 = vmatpush2.xpose.msra.mxu0 0.0
    %175 = vmatprep.subr.mxu0 0.0
    %176 = vmatpush2.xpose.msra.mxu0 0.0
    %177 = vmatprep.subr.mxu0 0.0
    %178 = vmatpush2.xpose.msra.mxu0 0.0
    %179 = vmatprep.subr.mxu0 0.0
    %180 = vmatpush2.xpose.msra.mxu0 0.0
    %181 = vmatprep.subr.mxu0 0.0
    %182 = vmatpush2.xpose.msra.mxu0 0.0
    %183 = vmatprep.subr.mxu0 0.0
    %184 = vmatpush2.xpose.msra.mxu0 0.0
    %185 = vmatprep.subr.mxu0 0.0
    %186 = vmatpush2.xpose.msra.mxu0 0.0
    %187 = vmatprep.subr.mxu0 0.0
    %188 = vmatpush2.xpose.msra.mxu0 0.0
    %189 = vmatprep.subr.mxu0 0.0
    %190 = vmatpush2.xpose.msra.mxu0 0.0
    %191 = vmatprep.subr.mxu0 0.0
    %192 = vmatpush2.xpose.msra.mxu0 0.0
    %193 = vmatprep.subr.mxu0 0.0
    %194 = vmatpush2.xpose.msra.mxu0 0.0
    %195 = vmatprep.subr.mxu0 0.0
    %196 = vmatpush2.xpose.msra.mxu0 0.0
    %197 = vmatprep.subr.mxu0 0.0
    %198 = vmatpush2.xpose.msra.mxu0 0.0
    %199 = vmatprep.subr.mxu0 0.0
    %200 = vmatpush2.xpose.msra.mxu0 0.0
    %201 = vmatprep.subr.mxu0 0.0
    %202 = vmatpush2.xpose.msra.mxu0 0.0
    %203 = vmatprep.mubr.f32.mxu0 0.0
    %204 = vmatmul.mubr.f32.gmra.mxu0 %v134
    %v205 = vpop.f32.mrf.mxu0
    %v206 = vadd.f32 0.0, %v205
    %v207 = vpop.f32.mrf.mxu0
    %208 = vdwg.mxu0
    %v210 = vsel %vm132, %v85, 0
    %v213 = vsel %vm132, %v93, 0
    %215 = vmatprep.subr.mxu0 0.0
    %216 = vmatpush1.xpose.msra.mxu0 0.0
    %217 = vmatprep.subr.mxu0 0.0
    %218 = vmatpush1.xpose.msra.mxu0 0.0
    %219 = vmatprep.subr.mxu0 0.0
    %220 = vmatpush1.xpose.msra.mxu0 0.0
    %221 = vmatprep.subr.mxu0 0.0
    %222 = vmatpush1.xpose.msra.mxu0 0.0
    %223 = vmatprep.subr.mxu0 0.0
    %224 = vmatpush1.xpose.msra.mxu0 0.0
    %225 = vmatprep.subr.mxu0 0.0
    %226 = vmatpush1.xpose.msra.mxu0 0.0
    %227 = vmatprep.subr.mxu0 0.0
    %228 = vmatpush1.xpose.msra.mxu0 0.0
    %229 = vmatprep.subr.mxu0 0.0
    %230 = vmatpush1.xpose.msra.mxu0 0.0
    %231 = vmatprep.subr.mxu0 0.0
    %232 = vmatpush1.xpose.msra.mxu0 0.0
    %233 = vmatprep.subr.mxu0 0.0
    %234 = vmatpush1.xpose.msra.mxu0 0.0
    %235 = vmatprep.subr.mxu0 0.0
    %236 = vmatpush1.xpose.msra.mxu0 0.0
    %237 = vmatprep.subr.mxu0 0.0
    %238 = vmatpush1.xpose.msra.mxu0 0.0
    %239 = vmatprep.subr.mxu0 0.0
    %240 = vmatpush1.xpose.msra.mxu0 0.0
    %241 = vmatprep.subr.mxu0 0.0
    %242 = vmatpush1.xpose.msra.mxu0 0.0
    %243 = vmatprep.subr.mxu0 0.0
    %244 = vmatpush1.xpose.msra.mxu0 0.0
    %245 = vmatprep.subr.mxu0 0.0
    %246 = vmatpush1.xpose.msra.mxu0 %v213
    %247 = vmatprep.subr.mxu0 0.0
    %248 = vmatpush2.xpose.msra.mxu0 0.0
    %249 = vmatprep.subr.mxu0 0.0
    %250 = vmatpush2.xpose.msra.mxu0 0.0
    %251 = vmatprep.subr.mxu0 0.0
    %252 = vmatpush2.xpose.msra.mxu0 0.0
    %253 = vmatprep.subr.mxu0 0.0
    %254 = vmatpush2.xpose.msra.mxu0 0.0
    %255 = vmatprep.subr.mxu0 0.0
    %256 = vmatpush2.xpose.msra.mxu0 0.0
    %257 = vmatprep.subr.mxu0 0.0
    %258 = vmatpush2.xpose.msra.mxu0 0.0
    %259 = vmatprep.subr.mxu0 0.0
    %260 = vmatpush2.xpose.msra.mxu0 0.0
    %261 = vmatprep.subr.mxu0 0.0
    %262 = vmatpush2.xpose.msra.mxu0 0.0
    %263 = vmatprep.subr.mxu0 0.0
    %264 = vmatpush2.xpose.msra.mxu0 0.0
    %265 = vmatprep.subr.mxu0 0.0
    %266 = vmatpush2.xpose.msra.mxu0 0.0
    %267 = vmatprep.subr.mxu0 0.0
    %268 = vmatpush2.xpose.msra.mxu0 0.0
    %269 = vmatprep.subr.mxu0 0.0
    %270 = vmatpush2.xpose.msra.mxu0 0.0
    %271 = vmatprep.subr.mxu0 0.0
    %272 = vmatpush2.xpose.msra.mxu0 0.0
    %273 = vmatprep.subr.mxu0 0.0
    %274 = vmatpush2.xpose.msra.mxu0 0.0
    %275 = vmatprep.subr.mxu0 0.0
    %276 = vmatpush2.xpose.msra.mxu0 0.0
    %277 = vmatprep.subr.mxu0 0.0
    %278 = vmatpush2.xpose.msra.mxu0 0.0
    %279 = vmatprep.mubr.f32.mxu0 0.0
    %280 = vmatmul.mubr.f32.gmra.mxu0 %v210
    %v281 = vpop.f32.mrf.mxu0
    %v282 = vadd.f32 0.0, %v281
    %v283 = vpop.f32.mrf.mxu0
    %284 = vdwg.mxu0
    %v286 = vsel %vm132, %v86, 0
    %v289 = vsel %vm132, %v94, 0
    %291 = vmatprep.subr.mxu0 0.0
    %292 = vmatpush1.xpose.msra.mxu0 0.0
    %293 = vmatprep.subr.mxu0 0.0
    %294 = vmatpush1.xpose.msra.mxu0 0.0
    %295 = vmatprep.subr.mxu0 0.0
    %296 = vmatpush1.xpose.msra.mxu0 0.0
    %297 = vmatprep.subr.mxu0 0.0
    %298 = vmatpush1.xpose.msra.mxu0 0.0
    %299 = vmatprep.subr.mxu0 0.0
    %300 = vmatpush1.xpose.msra.mxu0 0.0
    %301 = vmatprep.subr.mxu0 0.0
    %302 = vmatpush1.xpose.msra.mxu0 0.0
    %303 = vmatprep.subr.mxu0 0.0
    %304 = vmatpush1.xpose.msra.mxu0 0.0
    %305 = vmatprep.subr.mxu0 0.0
    %306 = vmatpush1.xpose.msra.mxu0 0.0
    %307 = vmatprep.subr.mxu0 0.0
    %308 = vmatpush1.xpose.msra.mxu0 0.0
    %309 = vmatprep.subr.mxu0 0.0
    %310 = vmatpush1.xpose.msra.mxu0 0.0
    %311 = vmatprep.subr.mxu0 0.0
    %312 = vmatpush1.xpose.msra.mxu0 0.0
    %313 = vmatprep.subr.mxu0 0.0
    %314 = vmatpush1.xpose.msra.mxu0 0.0
    %315 = vmatprep.subr.mxu0 0.0
    %316 = vmatpush1.xpose.msra.mxu0 0.0
    %317 = vmatprep.subr.mxu0 0.0
    %318 = vmatpush1.xpose.msra.mxu0 0.0
    %319 = vmatprep.subr.mxu0 0.0
    %320 = vmatpush1.xpose.msra.mxu0 0.0
    %321 = vmatprep.subr.mxu0 0.0
    %322 = vmatpush1.xpose.msra.mxu0 %v289
    %323 = vmatprep.subr.mxu0 0.0
    %324 = vmatpush2.xpose.msra.mxu0 0.0
    %325 = vmatprep.subr.mxu0 0.0
    %326 = vmatpush2.xpose.msra.mxu0 0.0
    %327 = vmatprep.subr.mxu0 0.0
    %328 = vmatpush2.xpose.msra.mxu0 0.0
    %329 = vmatprep.subr.mxu0 0.0
    %330 = vmatpush2.xpose.msra.mxu0 0.0
    %331 = vmatprep.subr.mxu0 0.0
    %332 = vmatpush2.xpose.msra.mxu0 0.0
    %333 = vmatprep.subr.mxu0 0.0
    %334 = vmatpush2.xpose.msra.mxu0 0.0
    %335 = vmatprep.subr.mxu0 0.0
    %336 = vmatpush2.xpose.msra.mxu0 0.0
    %337 = vmatprep.subr.mxu0 0.0
    %338 = vmatpush2.xpose.msra.mxu0 0.0
    %339 = vmatprep.subr.mxu0 0.0
    %340 = vmatpush2.xpose.msra.mxu0 0.0
    %341 = vmatprep.subr.mxu0 0.0
    %342 = vmatpush2.xpose.msra.mxu0 0.0
    %343 = vmatprep.subr.mxu0 0.0
    %344 = vmatpush2.xpose.msra.mxu0 0.0
    %345 = vmatprep.subr.mxu0 0.0
    %346 = vmatpush2.xpose.msra.mxu0 0.0
    %347 = vmatprep.subr.mxu0 0.0
    %348 = vmatpush2.xpose.msra.mxu0 0.0
    %349 = vmatprep.subr.mxu0 0.0
    %350 = vmatpush2.xpose.msra.mxu0 0.0
    %351 = vmatprep.subr.mxu0 0.0
    %352 = vmatpush2.xpose.msra.mxu0 0.0
    %353 = vmatprep.subr.mxu0 0.0
    %354 = vmatpush2.xpose.msra.mxu0 0.0
    %355 = vmatprep.mubr.f32.mxu0 0.0
    %356 = vmatmul.mubr.f32.gmra.mxu0 %v286
    %v357 = vpop.f32.mrf.mxu0
    %v358 = vadd.f32 0.0, %v357
    %v359 = vpop.f32.mrf.mxu0
    %360 = vdwg.mxu0
    %v362 = vsel %vm132, %v87, 0
    %v365 = vsel %vm132, %v95, 0
    %367 = vmatprep.subr.mxu0 0.0
    %368 = vmatpush1.xpose.msra.mxu0 0.0
    %369 = vmatprep.subr.mxu0 0.0
    %370 = vmatpush1.xpose.msra.mxu0 0.0
    %371 = vmatprep.subr.mxu0 0.0
    %372 = vmatpush1.xpose.msra.mxu0 0.0
    %373 = vmatprep.subr.mxu0 0.0
    %374 = vmatpush1.xpose.msra.mxu0 0.0
    %375 = vmatprep.subr.mxu0 0.0
    %376 = vmatpush1.xpose.msra.mxu0 0.0
    %377 = vmatprep.subr.mxu0 0.0
    %378 = vmatpush1.xpose.msra.mxu0 0.0
    %379 = vmatprep.subr.mxu0 0.0
    %380 = vmatpush1.xpose.msra.mxu0 0.0
    %381 = vmatprep.subr.mxu0 0.0
    %382 = vmatpush1.xpose.msra.mxu0 0.0
    %383 = vmatprep.subr.mxu0 0.0
    %384 = vmatpush1.xpose.msra.mxu0 0.0
    %385 = vmatprep.subr.mxu0 0.0
    %386 = vmatpush1.xpose.msra.mxu0 0.0
    %387 = vmatprep.subr.mxu0 0.0
    %388 = vmatpush1.xpose.msra.mxu0 0.0
    %389 = vmatprep.subr.mxu0 0.0
    %390 = vmatpush1.xpose.msra.mxu0 0.0
    %391 = vmatprep.subr.mxu0 0.0
    %392 = vmatpush1.xpose.msra.mxu0 0.0
    %393 = vmatprep.subr.mxu0 0.0
    %394 = vmatpush1.xpose.msra.mxu0 0.0
    %395 = vmatprep.subr.mxu0 0.0
    %396 = vmatpush1.xpose.msra.mxu0 0.0
    %397 = vmatprep.subr.mxu0 0.0
    %398 = vmatpush1.xpose.msra.mxu0 %v365
    %399 = vmatprep.subr.mxu0 0.0
    %400 = vmatpush2.xpose.msra.mxu0 0.0
    %401 = vmatprep.subr.mxu0 0.0
    %402 = vmatpush2.xpose.msra.mxu0 0.0
    %403 = vmatprep.subr.mxu0 0.0
    %404 = vmatpush2.xpose.msra.mxu0 0.0
    %405 = vmatprep.subr.mxu0 0.0
    %406 = vmatpush2.xpose.msra.mxu0 0.0
    %407 = vmatprep.subr.mxu0 0.0
    %408 = vmatpush2.xpose.msra.mxu0 0.0
    %409 = vmatprep.subr.mxu0 0.0
    %410 = vmatpush2.xpose.msra.mxu0 0.0
    %411 = vmatprep.subr.mxu0 0.0
    %412 = vmatpush2.xpose.msra.mxu0 0.0
    %413 = vmatprep.subr.mxu0 0.0
    %414 = vmatpush2.xpose.msra.mxu0 0.0
    %415 = vmatprep.subr.mxu0 0.0
    %416 = vmatpush2.xpose.msra.mxu0 0.0
    %417 = vmatprep.subr.mxu0 0.0
    %418 = vmatpush2.xpose.msra.mxu0 0.0
    %419 = vmatprep.subr.mxu0 0.0
    %420 = vmatpush2.xpose.msra.mxu0 0.0
    %421 = vmatprep.subr.mxu0 0.0
    %422 = vmatpush2.xpose.msra.mxu0 0.0
    %423 = vmatprep.subr.mxu0 0.0
    %424 = vmatpush2.xpose.msra.mxu0 0.0
    %425 = vmatprep.subr.mxu0 0.0
    %426 = vmatpush2.xpose.msra.mxu0 0.0
    %427 = vmatprep.subr.mxu0 0.0
    %428 = vmatpush2.xpose.msra.mxu0 0.0
    %429 = vmatprep.subr.mxu0 0.0
    %430 = vmatpush2.xpose.msra.mxu0 0.0
    %431 = vmatprep.mubr.f32.mxu0 0.0
    %432 = vmatmul.mubr.f32.gmra.mxu0 %v362
    %v433 = vpop.f32.mrf.mxu0
    %v434 = vadd.f32 0.0, %v433
    %v435 = vpop.f32.mrf.mxu0
    %436 = vdwg.mxu0
    %v438 = vsel %vm132, %v88, 0
    %v441 = vsel %vm132, %v96, 0
    %443 = vmatprep.subr.mxu0 0.0
    %444 = vmatpush1.xpose.msra.mxu0 0.0
    %445 = vmatprep.subr.mxu0 0.0
    %446 = vmatpush1.xpose.msra.mxu0 0.0
    %447 = vmatprep.subr.mxu0 0.0
    %448 = vmatpush1.xpose.msra.mxu0 0.0
    %449 = vmatprep.subr.mxu0 0.0
    %450 = vmatpush1.xpose.msra.mxu0 0.0
    %451 = vmatprep.subr.mxu0 0.0
    %452 = vmatpush1.xpose.msra.mxu0 0.0
    %453 = vmatprep.subr.mxu0 0.0
    %454 = vmatpush1.xpose.msra.mxu0 0.0
    %455 = vmatprep.subr.mxu0 0.0
    %456 = vmatpush1.xpose.msra.mxu0 0.0
    %457 = vmatprep.subr.mxu0 0.0
    %458 = vmatpush1.xpose.msra.mxu0 0.0
    %459 = vmatprep.subr.mxu0 0.0
    %460 = vmatpush1.xpose.msra.mxu0 0.0
    %461 = vmatprep.subr.mxu0 0.0
    %462 = vmatpush1.xpose.msra.mxu0 0.0
    %463 = vmatprep.subr.mxu0 0.0
    %464 = vmatpush1.xpose.msra.mxu0 0.0
    %465 = vmatprep.subr.mxu0 0.0
    %466 = vmatpush1.xpose.msra.mxu0 0.0
    %467 = vmatprep.subr.mxu0 0.0
    %468 = vmatpush1.xpose.msra.mxu0 0.0
    %469 = vmatprep.subr.mxu0 0.0
    %470 = vmatpush1.xpose.msra.mxu0 0.0
    %471 = vmatprep.subr.mxu0 0.0
    %472 = vmatpush1.xpose.msra.mxu0 0.0
    %473 = vmatprep.subr.mxu0 0.0
    %474 = vmatpush1.xpose.msra.mxu0 %v441
    %475 = vmatprep.subr.mxu0 0.0
    %476 = vmatpush2.xpose.msra.mxu0 0.0
    %477 = vmatprep.subr.mxu0 0.0
    %478 = vmatpush2.xpose.msra.mxu0 0.0
    %479 = vmatprep.subr.mxu0 0.0
    %480 = vmatpush2.xpose.msra.mxu0 0.0
    %481 = vmatprep.subr.mxu0 0.0
    %482 = vmatpush2.xpose.msra.mxu0 0.0
    %483 = vmatprep.subr.mxu0 0.0
    %484 = vmatpush2.xpose.msra.mxu0 0.0
    %485 = vmatprep.subr.mxu0 0.0
    %486 = vmatpush2.xpose.msra.mxu0 0.0
    %487 = vmatprep.subr.mxu0 0.0
    %488 = vmatpush2.xpose.msra.mxu0 0.0
    %489 = vmatprep.subr.mxu0 0.0
    %490 = vmatpush2.xpose.msra.mxu0 0.0
    %491 = vmatprep.subr.mxu0 0.0
    %492 = vmatpush2.xpose.msra.mxu0 0.0
    %493 = vmatprep.subr.mxu0 0.0
    %494 = vmatpush2.xpose.msra.mxu0 0.0
    %495 = vmatprep.subr.mxu0 0.0
    %496 = vmatpush2.xpose.msra.mxu0 0.0
    %497 = vmatprep.subr.mxu0 0.0
    %498 = vmatpush2.xpose.msra.mxu0 0.0
    %499 = vmatprep.subr.mxu0 0.0
    %500 = vmatpush2.xpose.msra.mxu0 0.0
    %501 = vmatprep.subr.mxu0 0.0
    %502 = vmatpush2.xpose.msra.mxu0 0.0
    %503 = vmatprep.subr.mxu0 0.0
    %504 = vmatpush2.xpose.msra.mxu0 0.0
    %505 = vmatprep.subr.mxu0 0.0
    %506 = vmatpush2.xpose.msra.mxu0 0.0
    %507 = vmatprep.mubr.f32.mxu0 0.0
    %508 = vmatmul.mubr.f32.gmra.mxu0 %v438
    %v509 = vpop.f32.mrf.mxu0
    %v510 = vadd.f32 0.0, %v509
    %v511 = vpop.f32.mrf.mxu0
    %512 = vdwg.mxu0
    %v514 = vsel %vm132, %v89, 0
    %v517 = vsel %vm132, %v97, 0
    %519 = vmatprep.subr.mxu0 0.0
    %520 = vmatpush1.xpose.msra.mxu0 0.0
    %521 = vmatprep.subr.mxu0 0.0
    %522 = vmatpush1.xpose.msra.mxu0 0.0
    %523 = vmatprep.subr.mxu0 0.0
    %524 = vmatpush1.xpose.msra.mxu0 0.0
    %525 = vmatprep.subr.mxu0 0.0
    %526 = vmatpush1.xpose.msra.mxu0 0.0
    %527 = vmatprep.subr.mxu0 0.0
    %528 = vmatpush1.xpose.msra.mxu0 0.0
    %529 = vmatprep.subr.mxu0 0.0
    %530 = vmatpush1.xpose.msra.mxu0 0.0
    %531 = vmatprep.subr.mxu0 0.0
    %532 = vmatpush1.xpose.msra.mxu0 0.0
    %533 = vmatprep.subr.mxu0 0.0
    %534 = vmatpush1.xpose.msra.mxu0 0.0
    %535 = vmatprep.subr.mxu0 0.0
    %536 = vmatpush1.xpose.msra.mxu0 0.0
    %537 = vmatprep.subr.mxu0 0.0
    %538 = vmatpush1.xpose.msra.mxu0 0.0
    %539 = vmatprep.subr.mxu0 0.0
    %540 = vmatpush1.xpose.msra.mxu0 0.0
    %541 = vmatprep.subr.mxu0 0.0
    %542 = vmatpush1.xpose.msra.mxu0 0.0
    %543 = vmatprep.subr.mxu0 0.0
    %544 = vmatpush1.xpose.msra.mxu0 0.0
    %545 = vmatprep.subr.mxu0 0.0
    %546 = vmatpush1.xpose.msra.mxu0 0.0
    %547 = vmatprep.subr.mxu0 0.0
    %548 = vmatpush1.xpose.msra.mxu0 0.0
    %549 = vmatprep.subr.mxu0 0.0
    %550 = vmatpush1.xpose.msra.mxu0 %v517
    %551 = vmatprep.subr.mxu0 0.0
    %552 = vmatpush2.xpose.msra.mxu0 0.0
    %553 = vmatprep.subr.mxu0 0.0
    %554 = vmatpush2.xpose.msra.mxu0 0.0
    %555 = vmatprep.subr.mxu0 0.0
    %556 = vmatpush2.xpose.msra.mxu0 0.0
    %557 = vmatprep.subr.mxu0 0.0
    %558 = vmatpush2.xpose.msra.mxu0 0.0
    %559 = vmatprep.subr.mxu0 0.0
    %560 = vmatpush2.xpose.msra.mxu0 0.0
    %561 = vmatprep.subr.mxu0 0.0
    %562 = vmatpush2.xpose.msra.mxu0 0.0
    %563 = vmatprep.subr.mxu0 0.0
    %564 = vmatpush2.xpose.msra.mxu0 0.0
    %565 = vmatprep.subr.mxu0 0.0
    %566 = vmatpush2.xpose.msra.mxu0 0.0
    %567 = vmatprep.subr.mxu0 0.0
    %568 = vmatpush2.xpose.msra.mxu0 0.0
    %569 = vmatprep.subr.mxu0 0.0
    %570 = vmatpush2.xpose.msra.mxu0 0.0
    %571 = vmatprep.subr.mxu0 0.0
    %572 = vmatpush2.xpose.msra.mxu0 0.0
    %573 = vmatprep.subr.mxu0 0.0
    %574 = vmatpush2.xpose.msra.mxu0 0.0
    %575 = vmatprep.subr.mxu0 0.0
    %576 = vmatpush2.xpose.msra.mxu0 0.0
    %577 = vmatprep.subr.mxu0 0.0
    %578 = vmatpush2.xpose.msra.mxu0 0.0
    %579 = vmatprep.subr.mxu0 0.0
    %580 = vmatpush2.xpose.msra.mxu0 0.0
    %581 = vmatprep.subr.mxu0 0.0
    %582 = vmatpush2.xpose.msra.mxu0 0.0
    %583 = vmatprep.mubr.f32.mxu0 0.0
    %584 = vmatmul.mubr.f32.gmra.mxu0 %v514
    %v585 = vpop.f32.mrf.mxu0
    %v586 = vadd.f32 0.0, %v585
    %v587 = vpop.f32.mrf.mxu0
    %588 = vdwg.mxu0
    %v590 = vsel %vm132, %v90, 0
    %v593 = vsel %vm132, %v98, 0
    %595 = vmatprep.subr.mxu0 0.0
    %596 = vmatpush1.xpose.msra.mxu0 0.0
    %597 = vmatprep.subr.mxu0 0.0
    %598 = vmatpush1.xpose.msra.mxu0 0.0
    %599 = vmatprep.subr.mxu0 0.0
    %600 = vmatpush1.xpose.msra.mxu0 0.0
    %601 = vmatprep.subr.mxu0 0.0
    %602 = vmatpush1.xpose.msra.mxu0 0.0
    %603 = vmatprep.subr.mxu0 0.0
    %604 = vmatpush1.xpose.msra.mxu0 0.0
    %605 = vmatprep.subr.mxu0 0.0
    %606 = vmatpush1.xpose.msra.mxu0 0.0
    %607 = vmatprep.subr.mxu0 0.0
    %608 = vmatpush1.xpose.msra.mxu0 0.0
    %609 = vmatprep.subr.mxu0 0.0
    %610 = vmatpush1.xpose.msra.mxu0 0.0
    %611 = vmatprep.subr.mxu0 0.0
    %612 = vmatpush1.xpose.msra.mxu0 0.0
    %613 = vmatprep.subr.mxu0 0.0
    %614 = vmatpush1.xpose.msra.mxu0 0.0
    %615 = vmatprep.subr.mxu0 0.0
    %616 = vmatpush1.xpose.msra.mxu0 0.0
    %617 = vmatprep.subr.mxu0 0.0
    %618 = vmatpush1.xpose.msra.mxu0 0.0
    %619 = vmatprep.subr.mxu0 0.0
    %620 = vmatpush1.xpose.msra.mxu0 0.0
    %621 = vmatprep.subr.mxu0 0.0
    %622 = vmatpush1.xpose.msra.mxu0 0.0
    %623 = vmatprep.subr.mxu0 0.0
    %624 = vmatpush1.xpose.msra.mxu0 0.0
    %625 = vmatprep.subr.mxu0 0.0
    %626 = vmatpush1.xpose.msra.mxu0 %v593
    %627 = vmatprep.subr.mxu0 0.0
    %628 = vmatpush2.xpose.msra.mxu0 0.0
    %629 = vmatprep.subr.mxu0 0.0
    %630 = vmatpush2.xpose.msra.mxu0 0.0
    %631 = vmatprep.subr.mxu0 0.0
    %632 = vmatpush2.xpose.msra.mxu0 0.0
    %633 = vmatprep.subr.mxu0 0.0
    %634 = vmatpush2.xpose.msra.mxu0 0.0
    %635 = vmatprep.subr.mxu0 0.0
    %636 = vmatpush2.xpose.msra.mxu0 0.0
    %637 = vmatprep.subr.mxu0 0.0
    %638 = vmatpush2.xpose.msra.mxu0 0.0
    %639 = vmatprep.subr.mxu0 0.0
    %640 = vmatpush2.xpose.msra.mxu0 0.0
    %641 = vmatprep.subr.mxu0 0.0
    %642 = vmatpush2.xpose.msra.mxu0 0.0
    %643 = vmatprep.subr.mxu0 0.0
    %644 = vmatpush2.xpose.msra.mxu0 0.0
    %645 = vmatprep.subr.mxu0 0.0
    %646 = vmatpush2.xpose.msra.mxu0 0.0
    %647 = vmatprep.subr.mxu0 0.0
    %648 = vmatpush2.xpose.msra.mxu0 0.0
    %649 = vmatprep.subr.mxu0 0.0
    %650 = vmatpush2.xpose.msra.mxu0 0.0
    %651 = vmatprep.subr.mxu0 0.0
    %652 = vmatpush2.xpose.msra.mxu0 0.0
    %653 = vmatprep.subr.mxu0 0.0
    %654 = vmatpush2.xpose.msra.mxu0 0.0
    %655 = vmatprep.subr.mxu0 0.0
    %656 = vmatpush2.xpose.msra.mxu0 0.0
    %657 = vmatprep.subr.mxu0 0.0
    %658 = vmatpush2.xpose.msra.mxu0 0.0
    %659 = vmatprep.mubr.f32.mxu0 0.0
    %660 = vmatmul.mubr.f32.gmra.mxu0 %v590
    %v661 = vpop.f32.mrf.mxu0
    %v662 = vadd.f32 0.0, %v661
    %v663 = vpop.f32.mrf.mxu0
    %664 = vdwg.mxu0
    %v666 = vsel %vm132, %v91, 0
    %v669 = vsel %vm132, %v99, 0
    %671 = vmatprep.subr.mxu0 0.0
    %672 = vmatpush1.xpose.msra.mxu0 0.0
    %673 = vmatprep.subr.mxu0 0.0
    %674 = vmatpush1.xpose.msra.mxu0 0.0
    %675 = vmatprep.subr.mxu0 0.0
    %676 = vmatpush1.xpose.msra.mxu0 0.0
    %677 = vmatprep.subr.mxu0 0.0
    %678 = vmatpush1.xpose.msra.mxu0 0.0
    %679 = vmatprep.subr.mxu0 0.0
    %680 = vmatpush1.xpose.msra.mxu0 0.0
    %681 = vmatprep.subr.mxu0 0.0
    %682 = vmatpush1.xpose.msra.mxu0 0.0
    %683 = vmatprep.subr.mxu0 0.0
    %684 = vmatpush1.xpose.msra.mxu0 0.0
    %685 = vmatprep.subr.mxu0 0.0
    %686 = vmatpush1.xpose.msra.mxu0 0.0
    %687 = vmatprep.subr.mxu0 0.0
    %688 = vmatpush1.xpose.msra.mxu0 0.0
    %689 = vmatprep.subr.mxu0 0.0
    %690 = vmatpush1.xpose.msra.mxu0 0.0
    %691 = vmatprep.subr.mxu0 0.0
    %692 = vmatpush1.xpose.msra.mxu0 0.0
    %693 = vmatprep.subr.mxu0 0.0
    %694 = vmatpush1.xpose.msra.mxu0 0.0
    %695 = vmatprep.subr.mxu0 0.0
    %696 = vmatpush1.xpose.msra.mxu0 0.0
    %697 = vmatprep.subr.mxu0 0.0
    %698 = vmatpush1.xpose.msra.mxu0 0.0
    %699 = vmatprep.subr.mxu0 0.0
    %700 = vmatpush1.xpose.msra.mxu0 0.0
    %701 = vmatprep.subr.mxu0 0.0
    %702 = vmatpush1.xpose.msra.mxu0 %v669
    %703 = vmatprep.subr.mxu0 0.0
    %704 = vmatpush2.xpose.msra.mxu0 0.0
    %705 = vmatprep.subr.mxu0 0.0
    %706 = vmatpush2.xpose.msra.mxu0 0.0
    %707 = vmatprep.subr.mxu0 0.0
    %708 = vmatpush2.xpose.msra.mxu0 0.0
    %709 = vmatprep.subr.mxu0 0.0
    %710 = vmatpush2.xpose.msra.mxu0 0.0
    %711 = vmatprep.subr.mxu0 0.0
    %712 = vmatpush2.xpose.msra.mxu0 0.0
    %713 = vmatprep.subr.mxu0 0.0
    %714 = vmatpush2.xpose.msra.mxu0 0.0
    %715 = vmatprep.subr.mxu0 0.0
    %716 = vmatpush2.xpose.msra.mxu0 0.0
    %717 = vmatprep.subr.mxu0 0.0
    %718 = vmatpush2.xpose.msra.mxu0 0.0
    %719 = vmatprep.subr.mxu0 0.0
    %720 = vmatpush2.xpose.msra.mxu0 0.0
    %721 = vmatprep.subr.mxu0 0.0
    %722 = vmatpush2.xpose.msra.mxu0 0.0
    %723 = vmatprep.subr.mxu0 0.0
    %724 = vmatpush2.xpose.msra.mxu0 0.0
    %725 = vmatprep.subr.mxu0 0.0
    %726 = vmatpush2.xpose.msra.mxu0 0.0
    %727 = vmatprep.subr.mxu0 0.0
    %728 = vmatpush2.xpose.msra.mxu0 0.0
    %729 = vmatprep.subr.mxu0 0.0
    %730 = vmatpush2.xpose.msra.mxu0 0.0
    %731 = vmatprep.subr.mxu0 0.0
    %732 = vmatpush2.xpose.msra.mxu0 0.0
    %733 = vmatprep.subr.mxu0 0.0
    %734 = vmatpush2.xpose.msra.mxu0 0.0
    %735 = vmatprep.mubr.f32.mxu0 0.0
    %736 = vmatmul.mubr.f32.gmra.mxu0 %v666
    %v737 = vpop.f32.mrf.mxu0
    %v738 = vadd.f32 0.0, %v737
    %v739 = vpop.f32.mrf.mxu0
    %740 = vdwg.mxu0
    %vm741 = vcmp.ne.f32.partialorder %v124, 0.0
    %vm742 = vcmp.ne.f32.partialorder %v125, 0.0
    %vm743 = vcmp.ne.f32.partialorder %v126, 0.0
    %vm744 = vcmp.ne.f32.partialorder %v127, 0.0
    %vm745 = vcmp.ne.f32.partialorder %v128, 0.0
    %vm746 = vcmp.ne.f32.partialorder %v129, 0.0
    %vm747 = vcmp.ne.f32.partialorder %v130, 0.0
    %vm748 = vcmp.ne.f32.partialorder %v131, 0.0
    %v749 = vsel %vm741, -1e+09, %v206
    %v750 = vsel %vm742, -1e+09, %v282
    %v751 = vsel %vm743, -1e+09, %v358
    %v752 = vsel %vm744, -1e+09, %v434
    %v753 = vsel %vm745, -1e+09, %v510
    %v754 = vsel %vm746, -1e+09, %v586
    %v755 = vsel %vm747, -1e+09, %v662
    %v756 = vsel %vm748, -1e+09, %v738
    %vm757 = vcmask 64512
    %v758 = vsel %vm757, %v749, -inf
    %759 = vmax.xlane.f32.xlu0 %v758
    %v760 = vpop.xlane.xlu0 %759
    %v761 = vsel %vm757, %v750, -inf
    %762 = vmax.xlane.f32.xlu0 %v761
    %v763 = vpop.xlane.xlu0 %762
    %v764 = vsel %vm757, %v751, -inf
    %765 = vmax.xlane.f32.xlu0 %v764
    %v766 = vpop.xlane.xlu0 %765
    %v767 = vsel %vm757, %v752, -inf
    %768 = vmax.xlane.f32.xlu0 %v767
    %v769 = vpop.xlane.xlu0 %768
    %v770 = vsel %vm757, %v753, -inf
    %771 = vmax.xlane.f32.xlu0 %v770
    %v772 = vpop.xlane.xlu0 %771
    %v773 = vsel %vm757, %v754, -inf
    %774 = vmax.xlane.f32.xlu0 %v773
    %v775 = vpop.xlane.xlu0 %774
    %v776 = vsel %vm757, %v755, -inf
    %777 = vmax.xlane.f32.xlu0 %v776
    %v778 = vpop.xlane.xlu0 %777
    %v779 = vsel %vm757, %v756, -inf
    %780 = vmax.xlane.f32.xlu0 %v779
    %v781 = vpop.xlane.xlu0 %780
    %v782 = vsub.f32 %v749, %v760
    %v783 = vsub.f32 %v750, %v763
    %v784 = vsub.f32 %v751, %v766
    %v785 = vsub.f32 %v752, %v769
    %v786 = vsub.f32 %v753, %v772
    %v787 = vsub.f32 %v754, %v775
    %v788 = vsub.f32 %v755, %v778
    %v789 = vsub.f32 %v756, %v781
    %v790 = vmul.f32 %v782, 1.442695
    %v791 = vpow.pop %v790
    %v792 = vmul.f32 %v783, 1.442695
    %v793 = vpow.pop %v792
    %v794 = vmul.f32 %v784, 1.442695
    %v795 = vpow.pop %v794
    %v796 = vmul.f32 %v785, 1.442695
    %v797 = vpow.pop %v796
    %v798 = vmul.f32 %v786, 1.442695
    %v799 = vpow.pop %v798
    %v800 = vmul.f32 %v787, 1.442695
    %v801 = vpow.pop %v800
    %v802 = vmul.f32 %v788, 1.442695
    %v803 = vpow.pop %v802
    %v804 = vmul.f32 %v789, 1.442695
    %v805 = vpow.pop %v804
    %v806 = vsel %vm757, %v791, 0.0
    %807 = vadd.xlane.f32.xlu0 %v806
    %v808 = vpop.xlane.xlu0 %807
    %v809 = vsel %vm757, %v793, 0.0
    %810 = vadd.xlane.f32.xlu0 %v809
    %v811 = vpop.xlane.xlu0 %810
    %v812 = vsel %vm757, %v795, 0.0
    %813 = vadd.xlane.f32.xlu0 %v812
    %v814 = vpop.xlane.xlu0 %813
    %v815 = vsel %vm757, %v797, 0.0
    %816 = vadd.xlane.f32.xlu0 %v815
    %v817 = vpop.xlane.xlu0 %816
    %v818 = vsel %vm757, %v799, 0.0
    %819 = vadd.xlane.f32.xlu0 %v818
    %v820 = vpop.xlane.xlu0 %819
    %v821 = vsel %vm757, %v801, 0.0
    %822 = vadd.xlane.f32.xlu0 %v821
    %v823 = vpop.xlane.xlu0 %822
    %v824 = vsel %vm757, %v803, 0.0
    %825 = vadd.xlane.f32.xlu0 %v824
    %v826 = vpop.xlane.xlu0 %825
    %v827 = vsel %vm757, %v805, 0.0
    %828 = vadd.xlane.f32.xlu0 %v827
    %v829 = vpop.xlane.xlu0 %828
    %v830 = vrcp.pop %v808
    %v831 = vrcp.pop %v811
    %v832 = vrcp.pop %v814
    %v833 = vrcp.pop %v817
    %v834 = vrcp.pop %v820
    %v835 = vrcp.pop %v823
    %v836 = vrcp.pop %v826
    %v837 = vrcp.pop %v829
    %v838 = vmul.f32 %v808, %v830
    %v839 = vmul.f32 %v811, %v831
    %v840 = vmul.f32 %v814, %v832
    %v841 = vmul.f32 %v817, %v833
    %v842 = vmul.f32 %v820, %v834
    %v843 = vmul.f32 %v823, %v835
    %v844 = vmul.f32 %v826, %v836
    %v845 = vmul.f32 %v829, %v837
    %v846 = vsub.f32 2.0, %v838
    %v847 = vsub.f32 2.0, %v839
    %v848 = vsub.f32 2.0, %v840
    %v849 = vsub.f32 2.0, %v841
    %v850 = vsub.f32 2.0, %v842
    %v851 = vsub.f32 2.0, %v843
    %v852 = vsub.f32 2.0, %v844
    %v853 = vsub.f32 2.0, %v845
    %v854 = vmul.f32 %v830, %v846
    %v855 = vmul.f32 %v831, %v847
    %v856 = vmul.f32 %v832, %v848
    %v857 = vmul.f32 %v833, %v849
    %v858 = vmul.f32 %v834, %v850
    %v859 = vmul.f32 %v835, %v851
    %v860 = vmul.f32 %v836, %v852
    %v861 = vmul.f32 %v837, %v853
    %v862 = vmul.f32 %v791, %v854
    %v863 = vmul.f32 %v793, %v855
    %v864 = vmul.f32 %v795, %v856
    %v865 = vmul.f32 %v797, %v857
    %v866 = vmul.f32 %v799, %v858
    %v867 = vmul.f32 %v801, %v859
    %v868 = vmul.f32 %v803, %v860
    %v869 = vmul.f32 %v805, %v861
    %v871 = vsel %vm757, %v862, 0
    %873 = vmatprep.subr.mxu0 0.0
    %874 = vmatpush1.msra.mxu0 0.0
    %875 = vmatprep.subr.mxu0 0.0
    %876 = vmatpush1.msra.mxu0 0.0
    %877 = vmatprep.subr.mxu0 0.0
    %878 = vmatpush1.msra.mxu0 0.0
    %879 = vmatprep.subr.mxu0 0.0
    %880 = vmatpush1.msra.mxu0 0.0
    %881 = vmatprep.subr.mxu0 0.0
    %882 = vmatpush1.msra.mxu0 0.0
    %883 = vmatprep.subr.mxu0 0.0
    %884 = vmatpush1.msra.mxu0 0.0
    %885 = vmatprep.subr.mxu0 0.0
    %886 = vmatpush1.msra.mxu0 0.0
    %887 = vmatprep.subr.mxu0 0.0
    %888 = vmatpush1.msra.mxu0 0.0
    %889 = vmatprep.subr.mxu0 0.0
    %890 = vmatpush1.msra.mxu0 0.0
    %891 = vmatprep.subr.mxu0 0.0
    %892 = vmatpush1.msra.mxu0 0.0
    %893 = vmatprep.subr.mxu0 0.0
    %894 = vmatpush1.msra.mxu0 0.0
    %895 = vmatprep.subr.mxu0 0.0
    %896 = vmatpush1.msra.mxu0 0.0
    %897 = vmatprep.subr.mxu0 0.0
    %898 = vmatpush1.msra.mxu0 0.0
    %899 = vmatprep.subr.mxu0 0.0
    %900 = vmatpush1.msra.mxu0 0.0
    %901 = vmatprep.subr.mxu0 0.0
    %902 = vmatpush1.msra.mxu0 0.0
    %903 = vmatprep.subr.mxu0 0.0
    %904 = vmatpush1.msra.mxu0 %v100
    %905 = vmatprep.subr.mxu0 0.0
    %906 = vmatpush2.msra.mxu0 0.0
    %907 = vmatprep.subr.mxu0 0.0
    %908 = vmatpush2.msra.mxu0 0.0
    %909 = vmatprep.subr.mxu0 0.0
    %910 = vmatpush2.msra.mxu0 0.0
    %911 = vmatprep.subr.mxu0 0.0
    %912 = vmatpush2.msra.mxu0 0.0
    %913 = vmatprep.subr.mxu0 0.0
    %914 = vmatpush2.msra.mxu0 0.0
    %915 = vmatprep.subr.mxu0 0.0
    %916 = vmatpush2.msra.mxu0 0.0
    %917 = vmatprep.subr.mxu0 0.0
    %918 = vmatpush2.msra.mxu0 0.0
    %919 = vmatprep.subr.mxu0 0.0
    %920 = vmatpush2.msra.mxu0 0.0
    %921 = vmatprep.subr.mxu0 0.0
    %922 = vmatpush2.msra.mxu0 0.0
    %923 = vmatprep.subr.mxu0 0.0
    %924 = vmatpush2.msra.mxu0 0.0
    %925 = vmatprep.subr.mxu0 0.0
    %926 = vmatpush2.msra.mxu0 0.0
    %927 = vmatprep.subr.mxu0 0.0
    %928 = vmatpush2.msra.mxu0 0.0
    %929 = vmatprep.subr.mxu0 0.0
    %930 = vmatpush2.msra.mxu0 0.0
    %931 = vmatprep.subr.mxu0 0.0
    %932 = vmatpush2.msra.mxu0 0.0
    %933 = vmatprep.subr.mxu0 0.0
    %934 = vmatpush2.msra.mxu0 0.0
    %935 = vmatprep.subr.mxu0 0.0
    %936 = vmatpush2.msra.mxu0 0.0
    %937 = vmatprep.mubr.f32.mxu0 0.0
    %938 = vmatmul.mubr.f32.gmra.mxu0 %v871
    %v939 = vpop.f32.mrf.mxu0
    %v940 = vadd.f32 0.0, %v939
    %v941 = vpop.f32.mrf.mxu0
    %942 = vdwg.mxu0
    %v944 = vsel %vm757, %v863, 0
    %946 = vmatprep.subr.mxu0 0.0
    %947 = vmatpush1.msra.mxu0 0.0
    %948 = vmatprep.subr.mxu0 0.0
    %949 = vmatpush1.msra.mxu0 0.0
    %950 = vmatprep.subr.mxu0 0.0
    %951 = vmatpush1.msra.mxu0 0.0
    %952 = vmatprep.subr.mxu0 0.0
    %953 = vmatpush1.msra.mxu0 0.0
    %954 = vmatprep.subr.mxu0 0.0
    %955 = vmatpush1.msra.mxu0 0.0
    %956 = vmatprep.subr.mxu0 0.0
    %957 = vmatpush1.msra.mxu0 0.0
    %958 = vmatprep.subr.mxu0 0.0
    %959 = vmatpush1.msra.mxu0 0.0
    %960 = vmatprep.subr.mxu0 0.0
    %961 = vmatpush1.msra.mxu0 0.0
    %962 = vmatprep.subr.mxu0 0.0
    %963 = vmatpush1.msra.mxu0 0.0
    %964 = vmatprep.subr.mxu0 0.0
    %965 = vmatpush1.msra.mxu0 0.0
    %966 = vmatprep.subr.mxu0 0.0
    %967 = vmatpush1.msra.mxu0 0.0
    %968 = vmatprep.subr.mxu0 0.0
    %969 = vmatpush1.msra.mxu0 0.0
    %970 = vmatprep.subr.mxu0 0.0
    %971 = vmatpush1.msra.mxu0 0.0
    %972 = vmatprep.subr.mxu0 0.0
    %973 = vmatpush1.msra.mxu0 0.0
    %974 = vmatprep.subr.mxu0 0.0
    %975 = vmatpush1.msra.mxu0 0.0
    %976 = vmatprep.subr.mxu0 0.0
    %977 = vmatpush1.msra.mxu0 %v101
    %978 = vmatprep.subr.mxu0 0.0
    %979 = vmatpush2.msra.mxu0 0.0
    %980 = vmatprep.subr.mxu0 0.0
    %981 = vmatpush2.msra.mxu0 0.0
    %982 = vmatprep.subr.mxu0 0.0
    %983 = vmatpush2.msra.mxu0 0.0
    %984 = vmatprep.subr.mxu0 0.0
    %985 = vmatpush2.msra.mxu0 0.0
    %986 = vmatprep.subr.mxu0 0.0
    %987 = vmatpush2.msra.mxu0 0.0
    %988 = vmatprep.subr.mxu0 0.0
    %989 = vmatpush2.msra.mxu0 0.0
    %990 = vmatprep.subr.mxu0 0.0
    %991 = vmatpush2.msra.mxu0 0.0
    %992 = vmatprep.subr.mxu0 0.0
    %993 = vmatpush2.msra.mxu0 0.0
    %994 = vmatprep.subr.mxu0 0.0
    %995 = vmatpush2.msra.mxu0 0.0
    %996 = vmatprep.subr.mxu0 0.0
    %997 = vmatpush2.msra.mxu0 0.0
    %998 = vmatprep.subr.mxu0 0.0
    %999 = vmatpush2.msra.mxu0 0.0
    %1000 = vmatprep.subr.mxu0 0.0
    %1001 = vmatpush2.msra.mxu0 0.0
    %1002 = vmatprep.subr.mxu0 0.0
    %1003 = vmatpush2.msra.mxu0 0.0
    %1004 = vmatprep.subr.mxu0 0.0
    %1005 = vmatpush2.msra.mxu0 0.0
    %1006 = vmatprep.subr.mxu0 0.0
    %1007 = vmatpush2.msra.mxu0 0.0
    %1008 = vmatprep.subr.mxu0 0.0
    %1009 = vmatpush2.msra.mxu0 0.0
    %1010 = vmatprep.mubr.f32.mxu0 0.0
    %1011 = vmatmul.mubr.f32.gmra.mxu0 %v944
    %v1012 = vpop.f32.mrf.mxu0
    %v1013 = vadd.f32 0.0, %v1012
    %v1014 = vpop.f32.mrf.mxu0
    %1015 = vdwg.mxu0
    %v1017 = vsel %vm757, %v864, 0
    %1019 = vmatprep.subr.mxu0 0.0
    %1020 = vmatpush1.msra.mxu0 0.0
    %1021 = vmatprep.subr.mxu0 0.0
    %1022 = vmatpush1.msra.mxu0 0.0
    %1023 = vmatprep.subr.mxu0 0.0
    %1024 = vmatpush1.msra.mxu0 0.0
    %1025 = vmatprep.subr.mxu0 0.0
    %1026 = vmatpush1.msra.mxu0 0.0
    %1027 = vmatprep.subr.mxu0 0.0
    %1028 = vmatpush1.msra.mxu0 0.0
    %1029 = vmatprep.subr.mxu0 0.0
    %1030 = vmatpush1.msra.mxu0 0.0
    %1031 = vmatprep.subr.mxu0 0.0
    %1032 = vmatpush1.msra.mxu0 0.0
    %1033 = vmatprep.subr.mxu0 0.0
    %1034 = vmatpush1.msra.mxu0 0.0
    %1035 = vmatprep.subr.mxu0 0.0
    %1036 = vmatpush1.msra.mxu0 0.0
    %1037 = vmatprep.subr.mxu0 0.0
    %1038 = vmatpush1.msra.mxu0 0.0
    %1039 = vmatprep.subr.mxu0 0.0
    %1040 = vmatpush1.msra.mxu0 0.0
    %1041 = vmatprep.subr.mxu0 0.0
    %1042 = vmatpush1.msra.mxu0 0.0
    %1043 = vmatprep.subr.mxu0 0.0
    %1044 = vmatpush1.msra.mxu0 0.0
    %1045 = vmatprep.subr.mxu0 0.0
    %1046 = vmatpush1.msra.mxu0 0.0
    %1047 = vmatprep.subr.mxu0 0.0
    %1048 = vmatpush1.msra.mxu0 0.0
    %1049 = vmatprep.subr.mxu0 0.0
    %1050 = vmatpush1.msra.mxu0 %v102
    %1051 = vmatprep.subr.mxu0 0.0
    %1052 = vmatpush2.msra.mxu0 0.0
    %1053 = vmatprep.subr.mxu0 0.0
    %1054 = vmatpush2.msra.mxu0 0.0
    %1055 = vmatprep.subr.mxu0 0.0
    %1056 = vmatpush2.msra.mxu0 0.0
    %1057 = vmatprep.subr.mxu0 0.0
    %1058 = vmatpush2.msra.mxu0 0.0
    %1059 = vmatprep.subr.mxu0 0.0
    %1060 = vmatpush2.msra.mxu0 0.0
    %1061 = vmatprep.subr.mxu0 0.0
    %1062 = vmatpush2.msra.mxu0 0.0
    %1063 = vmatprep.subr.mxu0 0.0
    %1064 = vmatpush2.msra.mxu0 0.0
    %1065 = vmatprep.subr.mxu0 0.0
    %1066 = vmatpush2.msra.mxu0 0.0
    %1067 = vmatprep.subr.mxu0 0.0
    %1068 = vmatpush2.msra.mxu0 0.0
    %1069 = vmatprep.subr.mxu0 0.0
    %1070 = vmatpush2.msra.mxu0 0.0
    %1071 = vmatprep.subr.mxu0 0.0
    %1072 = vmatpush2.msra.mxu0 0.0
    %1073 = vmatprep.subr.mxu0 0.0
    %1074 = vmatpush2.msra.mxu0 0.0
    %1075 = vmatprep.subr.mxu0 0.0
    %1076 = vmatpush2.msra.mxu0 0.0
    %1077 = vmatprep.subr.mxu0 0.0
    %1078 = vmatpush2.msra.mxu0 0.0
    %1079 = vmatprep.subr.mxu0 0.0
    %1080 = vmatpush2.msra.mxu0 0.0
    %1081 = vmatprep.subr.mxu0 0.0
    %1082 = vmatpush2.msra.mxu0 0.0
    %1083 = vmatprep.mubr.f32.mxu0 0.0
    %1084 = vmatmul.mubr.f32.gmra.mxu0 %v1017
    %v1085 = vpop.f32.mrf.mxu0
    %v1086 = vadd.f32 0.0, %v1085
    %v1087 = vpop.f32.mrf.mxu0
    %1088 = vdwg.mxu0
    %v1090 = vsel %vm757, %v865, 0
    %1092 = vmatprep.subr.mxu0 0.0
    %1093 = vmatpush1.msra.mxu0 0.0
    %1094 = vmatprep.subr.mxu0 0.0
    %1095 = vmatpush1.msra.mxu0 0.0
    %1096 = vmatprep.subr.mxu0 0.0
    %1097 = vmatpush1.msra.mxu0 0.0
    %1098 = vmatprep.subr.mxu0 0.0
    %1099 = vmatpush1.msra.mxu0 0.0
    %1100 = vmatprep.subr.mxu0 0.0
    %1101 = vmatpush1.msra.mxu0 0.0
    %1102 = vmatprep.subr.mxu0 0.0
    %1103 = vmatpush1.msra.mxu0 0.0
    %1104 = vmatprep.subr.mxu0 0.0
    %1105 = vmatpush1.msra.mxu0 0.0
    %1106 = vmatprep.subr.mxu0 0.0
    %1107 = vmatpush1.msra.mxu0 0.0
    %1108 = vmatprep.subr.mxu0 0.0
    %1109 = vmatpush1.msra.mxu0 0.0
    %1110 = vmatprep.subr.mxu0 0.0
    %1111 = vmatpush1.msra.mxu0 0.0
    %1112 = vmatprep.subr.mxu0 0.0
    %1113 = vmatpush1.msra.mxu0 0.0
    %1114 = vmatprep.subr.mxu0 0.0
    %1115 = vmatpush1.msra.mxu0 0.0
    %1116 = vmatprep.subr.mxu0 0.0
    %1117 = vmatpush1.msra.mxu0 0.0
    %1118 = vmatprep.subr.mxu0 0.0
    %1119 = vmatpush1.msra.mxu0 0.0
    %1120 = vmatprep.subr.mxu0 0.0
    %1121 = vmatpush1.msra.mxu0 0.0
    %1122 = vmatprep.subr.mxu0 0.0
    %1123 = vmatpush1.msra.mxu0 %v103
    %1124 = vmatprep.subr.mxu0 0.0
    %1125 = vmatpush2.msra.mxu0 0.0
    %1126 = vmatprep.subr.mxu0 0.0
    %1127 = vmatpush2.msra.mxu0 0.0
    %1128 = vmatprep.subr.mxu0 0.0
    %1129 = vmatpush2.msra.mxu0 0.0
    %1130 = vmatprep.subr.mxu0 0.0
    %1131 = vmatpush2.msra.mxu0 0.0
    %1132 = vmatprep.subr.mxu0 0.0
    %1133 = vmatpush2.msra.mxu0 0.0
    %1134 = vmatprep.subr.mxu0 0.0
    %1135 = vmatpush2.msra.mxu0 0.0
    %1136 = vmatprep.subr.mxu0 0.0
    %1137 = vmatpush2.msra.mxu0 0.0
    %1138 = vmatprep.subr.mxu0 0.0
    %1139 = vmatpush2.msra.mxu0 0.0
    %1140 = vmatprep.subr.mxu0 0.0
    %1141 = vmatpush2.msra.mxu0 0.0
    %1142 = vmatprep.subr.mxu0 0.0
    %1143 = vmatpush2.msra.mxu0 0.0
    %1144 = vmatprep.subr.mxu0 0.0
    %1145 = vmatpush2.msra.mxu0 0.0
    %1146 = vmatprep.subr.mxu0 0.0
    %1147 = vmatpush2.msra.mxu0 0.0
    %1148 = vmatprep.subr.mxu0 0.0
    %1149 = vmatpush2.msra.mxu0 0.0
    %1150 = vmatprep.subr.mxu0 0.0
    %1151 = vmatpush2.msra.mxu0 0.0
    %1152 = vmatprep.subr.mxu0 0.0
    %1153 = vmatpush2.msra.mxu0 0.0
    %1154 = vmatprep.subr.mxu0 0.0
    %1155 = vmatpush2.msra.mxu0 0.0
    %1156 = vmatprep.mubr.f32.mxu0 0.0
    %1157 = vmatmul.mubr.f32.gmra.mxu0 %v1090
    %v1158 = vpop.f32.mrf.mxu0
    %v1159 = vadd.f32 0.0, %v1158
    %v1160 = vpop.f32.mrf.mxu0
    %1161 = vdwg.mxu0
    %v1163 = vsel %vm757, %v866, 0
    %1165 = vmatprep.subr.mxu0 0.0
    %1166 = vmatpush1.msra.mxu0 0.0
    %1167 = vmatprep.subr.mxu0 0.0
    %1168 = vmatpush1.msra.mxu0 0.0
    %1169 = vmatprep.subr.mxu0 0.0
    %1170 = vmatpush1.msra.mxu0 0.0
    %1171 = vmatprep.subr.mxu0 0.0
    %1172 = vmatpush1.msra.mxu0 0.0
    %1173 = vmatprep.subr.mxu0 0.0
    %1174 = vmatpush1.msra.mxu0 0.0
    %1175 = vmatprep.subr.mxu0 0.0
    %1176 = vmatpush1.msra.mxu0 0.0
    %1177 = vmatprep.subr.mxu0 0.0
    %1178 = vmatpush1.msra.mxu0 0.0
    %1179 = vmatprep.subr.mxu0 0.0
    %1180 = vmatpush1.msra.mxu0 0.0
    %1181 = vmatprep.subr.mxu0 0.0
    %1182 = vmatpush1.msra.mxu0 0.0
    %1183 = vmatprep.subr.mxu0 0.0
    %1184 = vmatpush1.msra.mxu0 0.0
    %1185 = vmatprep.subr.mxu0 0.0
    %1186 = vmatpush1.msra.mxu0 0.0
    %1187 = vmatprep.subr.mxu0 0.0
    %1188 = vmatpush1.msra.mxu0 0.0
    %1189 = vmatprep.subr.mxu0 0.0
    %1190 = vmatpush1.msra.mxu0 0.0
    %1191 = vmatprep.subr.mxu0 0.0
    %1192 = vmatpush1.msra.mxu0 0.0
    %1193 = vmatprep.subr.mxu0 0.0
    %1194 = vmatpush1.msra.mxu0 0.0
    %1195 = vmatprep.subr.mxu0 0.0
    %1196 = vmatpush1.msra.mxu0 %v104
    %1197 = vmatprep.subr.mxu0 0.0
    %1198 = vmatpush2.msra.mxu0 0.0
    %1199 = vmatprep.subr.mxu0 0.0
    %1200 = vmatpush2.msra.mxu0 0.0
    %1201 = vmatprep.subr.mxu0 0.0
    %1202 = vmatpush2.msra.mxu0 0.0
    %1203 = vmatprep.subr.mxu0 0.0
    %1204 = vmatpush2.msra.mxu0 0.0
    %1205 = vmatprep.subr.mxu0 0.0
    %1206 = vmatpush2.msra.mxu0 0.0
    %1207 = vmatprep.subr.mxu0 0.0
    %1208 = vmatpush2.msra.mxu0 0.0
    %1209 = vmatprep.subr.mxu0 0.0
    %1210 = vmatpush2.msra.mxu0 0.0
    %1211 = vmatprep.subr.mxu0 0.0
    %1212 = vmatpush2.msra.mxu0 0.0
    %1213 = vmatprep.subr.mxu0 0.0
    %1214 = vmatpush2.msra.mxu0 0.0
    %1215 = vmatprep.subr.mxu0 0.0
    %1216 = vmatpush2.msra.mxu0 0.0
    %1217 = vmatprep.subr.mxu0 0.0
    %1218 = vmatpush2.msra.mxu0 0.0
    %1219 = vmatprep.subr.mxu0 0.0
    %1220 = vmatpush2.msra.mxu0 0.0
    %1221 = vmatprep.subr.mxu0 0.0
    %1222 = vmatpush2.msra.mxu0 0.0
    %1223 = vmatprep.subr.mxu0 0.0
    %1224 = vmatpush2.msra.mxu0 0.0
    %1225 = vmatprep.subr.mxu0 0.0
    %1226 = vmatpush2.msra.mxu0 0.0
    %1227 = vmatprep.subr.mxu0 0.0
    %1228 = vmatpush2.msra.mxu0 0.0
    %1229 = vmatprep.mubr.f32.mxu0 0.0
    %1230 = vmatmul.mubr.f32.gmra.mxu0 %v1163
    %v1231 = vpop.f32.mrf.mxu0
    %v1232 = vadd.f32 0.0, %v1231
    %v1233 = vpop.f32.mrf.mxu0
    %1234 = vdwg.mxu0
    %v1236 = vsel %vm757, %v867, 0
    %1238 = vmatprep.subr.mxu0 0.0
    %1239 = vmatpush1.msra.mxu0 0.0
    %1240 = vmatprep.subr.mxu0 0.0
    %1241 = vmatpush1.msra.mxu0 0.0
    %1242 = vmatprep.subr.mxu0 0.0
    %1243 = vmatpush1.msra.mxu0 0.0
    %1244 = vmatprep.subr.mxu0 0.0
    %1245 = vmatpush1.msra.mxu0 0.0
    %1246 = vmatprep.subr.mxu0 0.0
    %1247 = vmatpush1.msra.mxu0 0.0
    %1248 = vmatprep.subr.mxu0 0.0
    %1249 = vmatpush1.msra.mxu0 0.0
    %1250 = vmatprep.subr.mxu0 0.0
    %1251 = vmatpush1.msra.mxu0 0.0
    %1252 = vmatprep.subr.mxu0 0.0
    %1253 = vmatpush1.msra.mxu0 0.0
    %1254 = vmatprep.subr.mxu0 0.0
    %1255 = vmatpush1.msra.mxu0 0.0
    %1256 = vmatprep.subr.mxu0 0.0
    %1257 = vmatpush1.msra.mxu0 0.0
    %1258 = vmatprep.subr.mxu0 0.0
    %1259 = vmatpush1.msra.mxu0 0.0
    %1260 = vmatprep.subr.mxu0 0.0
    %1261 = vmatpush1.msra.mxu0 0.0
    %1262 = vmatprep.subr.mxu0 0.0
    %1263 = vmatpush1.msra.mxu0 0.0
    %1264 = vmatprep.subr.mxu0 0.0
    %1265 = vmatpush1.msra.mxu0 0.0
    %1266 = vmatprep.subr.mxu0 0.0
    %1267 = vmatpush1.msra.mxu0 0.0
    %1268 = vmatprep.subr.mxu0 0.0
    %1269 = vmatpush1.msra.mxu0 %v105
    %1270 = vmatprep.subr.mxu0 0.0
    %1271 = vmatpush2.msra.mxu0 0.0
    %1272 = vmatprep.subr.mxu0 0.0
    %1273 = vmatpush2.msra.mxu0 0.0
    %1274 = vmatprep.subr.mxu0 0.0
    %1275 = vmatpush2.msra.mxu0 0.0
    %1276 = vmatprep.subr.mxu0 0.0
    %1277 = vmatpush2.msra.mxu0 0.0
    %1278 = vmatprep.subr.mxu0 0.0
    %1279 = vmatpush2.msra.mxu0 0.0
    %1280 = vmatprep.subr.mxu0 0.0
    %1281 = vmatpush2.msra.mxu0 0.0
    %1282 = vmatprep.subr.mxu0 0.0
    %1283 = vmatpush2.msra.mxu0 0.0
    %1284 = vmatprep.subr.mxu0 0.0
    %1285 = vmatpush2.msra.mxu0 0.0
    %1286 = vmatprep.subr.mxu0 0.0
    %1287 = vmatpush2.msra.mxu0 0.0
    %1288 = vmatprep.subr.mxu0 0.0
    %1289 = vmatpush2.msra.mxu0 0.0
    %1290 = vmatprep.subr.mxu0 0.0
    %1291 = vmatpush2.msra.mxu0 0.0
    %1292 = vmatprep.subr.mxu0 0.0
    %1293 = vmatpush2.msra.mxu0 0.0
    %1294 = vmatprep.subr.mxu0 0.0
    %1295 = vmatpush2.msra.mxu0 0.0
    %1296 = vmatprep.subr.mxu0 0.0
    %1297 = vmatpush2.msra.mxu0 0.0
    %1298 = vmatprep.subr.mxu0 0.0
    %1299 = vmatpush2.msra.mxu0 0.0
    %1300 = vmatprep.subr.mxu0 0.0
    %1301 = vmatpush2.msra.mxu0 0.0
    %1302 = vmatprep.mubr.f32.mxu0 0.0
    %1303 = vmatmul.mubr.f32.gmra.mxu0 %v1236
    %v1304 = vpop.f32.mrf.mxu0
    %v1305 = vadd.f32 0.0, %v1304
    %v1306 = vpop.f32.mrf.mxu0
    %1307 = vdwg.mxu0
    %v1309 = vsel %vm757, %v868, 0
    %1311 = vmatprep.subr.mxu0 0.0
    %1312 = vmatpush1.msra.mxu0 0.0
    %1313 = vmatprep.subr.mxu0 0.0
    %1314 = vmatpush1.msra.mxu0 0.0
    %1315 = vmatprep.subr.mxu0 0.0
    %1316 = vmatpush1.msra.mxu0 0.0
    %1317 = vmatprep.subr.mxu0 0.0
    %1318 = vmatpush1.msra.mxu0 0.0
    %1319 = vmatprep.subr.mxu0 0.0
    %1320 = vmatpush1.msra.mxu0 0.0
    %1321 = vmatprep.subr.mxu0 0.0
    %1322 = vmatpush1.msra.mxu0 0.0
    %1323 = vmatprep.subr.mxu0 0.0
    %1324 = vmatpush1.msra.mxu0 0.0
    %1325 = vmatprep.subr.mxu0 0.0
    %1326 = vmatpush1.msra.mxu0 0.0
    %1327 = vmatprep.subr.mxu0 0.0
    %1328 = vmatpush1.msra.mxu0 0.0
    %1329 = vmatprep.subr.mxu0 0.0
    %1330 = vmatpush1.msra.mxu0 0.0
    %1331 = vmatprep.subr.mxu0 0.0
    %1332 = vmatpush1.msra.mxu0 0.0
    %1333 = vmatprep.subr.mxu0 0.0
    %1334 = vmatpush1.msra.mxu0 0.0
    %1335 = vmatprep.subr.mxu0 0.0
    %1336 = vmatpush1.msra.mxu0 0.0
    %1337 = vmatprep.subr.mxu0 0.0
    %1338 = vmatpush1.msra.mxu0 0.0
    %1339 = vmatprep.subr.mxu0 0.0
    %1340 = vmatpush1.msra.mxu0 0.0
    %1341 = vmatprep.subr.mxu0 0.0
    %1342 = vmatpush1.msra.mxu0 %v106
    %1343 = vmatprep.subr.mxu0 0.0
    %1344 = vmatpush2.msra.mxu0 0.0
    %1345 = vmatprep.subr.mxu0 0.0
    %1346 = vmatpush2.msra.mxu0 0.0
    %1347 = vmatprep.subr.mxu0 0.0
    %1348 = vmatpush2.msra.mxu0 0.0
    %1349 = vmatprep.subr.mxu0 0.0
    %1350 = vmatpush2.msra.mxu0 0.0
    %1351 = vmatprep.subr.mxu0 0.0
    %1352 = vmatpush2.msra.mxu0 0.0
    %1353 = vmatprep.subr.mxu0 0.0
    %1354 = vmatpush2.msra.mxu0 0.0
    %1355 = vmatprep.subr.mxu0 0.0
    %1356 = vmatpush2.msra.mxu0 0.0
    %1357 = vmatprep.subr.mxu0 0.0
    %1358 = vmatpush2.msra.mxu0 0.0
    %1359 = vmatprep.subr.mxu0 0.0
    %1360 = vmatpush2.msra.mxu0 0.0
    %1361 = vmatprep.subr.mxu0 0.0
    %1362 = vmatpush2.msra.mxu0 0.0
    %1363 = vmatprep.subr.mxu0 0.0
    %1364 = vmatpush2.msra.mxu0 0.0
    %1365 = vmatprep.subr.mxu0 0.0
    %1366 = vmatpush2.msra.mxu0 0.0
    %1367 = vmatprep.subr.mxu0 0.0
    %1368 = vmatpush2.msra.mxu0 0.0
    %1369 = vmatprep.subr.mxu0 0.0
    %1370 = vmatpush2.msra.mxu0 0.0
    %1371 = vmatprep.subr.mxu0 0.0
    %1372 = vmatpush2.msra.mxu0 0.0
    %1373 = vmatprep.subr.mxu0 0.0
    %1374 = vmatpush2.msra.mxu0 0.0
    %1375 = vmatprep.mubr.f32.mxu0 0.0
    %1376 = vmatmul.mubr.f32.gmra.mxu0 %v1309
    %v1377 = vpop.f32.mrf.mxu0
    %v1378 = vadd.f32 0.0, %v1377
    %v1379 = vpop.f32.mrf.mxu0
    %1380 = vdwg.mxu0
    %v1382 = vsel %vm757, %v869, 0
    %1384 = vmatprep.subr.mxu0 0.0
    %1385 = vmatpush1.msra.mxu0 0.0
    %1386 = vmatprep.subr.mxu0 0.0
    %1387 = vmatpush1.msra.mxu0 0.0
    %1388 = vmatprep.subr.mxu0 0.0
    %1389 = vmatpush1.msra.mxu0 0.0
    %1390 = vmatprep.subr.mxu0 0.0
    %1391 = vmatpush1.msra.mxu0 0.0
    %1392 = vmatprep.subr.mxu0 0.0
    %1393 = vmatpush1.msra.mxu0 0.0
    %1394 = vmatprep.subr.mxu0 0.0
    %1395 = vmatpush1.msra.mxu0 0.0
    %1396 = vmatprep.subr.mxu0 0.0
    %1397 = vmatpush1.msra.mxu0 0.0
    %1398 = vmatprep.subr.mxu0 0.0
    %1399 = vmatpush1.msra.mxu0 0.0
    %1400 = vmatprep.subr.mxu0 0.0
    %1401 = vmatpush1.msra.mxu0 0.0
    %1402 = vmatprep.subr.mxu0 0.0
    %1403 = vmatpush1.msra.mxu0 0.0
    %1404 = vmatprep.subr.mxu0 0.0
    %1405 = vmatpush1.msra.mxu0 0.0
    %1406 = vmatprep.subr.mxu0 0.0
    %1407 = vmatpush1.msra.mxu0 0.0
    %1408 = vmatprep.subr.mxu0 0.0
    %1409 = vmatpush1.msra.mxu0 0.0
    %1410 = vmatprep.subr.mxu0 0.0
    %1411 = vmatpush1.msra.mxu0 0.0
    %1412 = vmatprep.subr.mxu0 0.0
    %1413 = vmatpush1.msra.mxu0 0.0
    %1414 = vmatprep.subr.mxu0 0.0
    %1415 = vmatpush1.msra.mxu0 %v107
    %1416 = vmatprep.subr.mxu0 0.0
    %1417 = vmatpush2.msra.mxu0 0.0
    %1418 = vmatprep.subr.mxu0 0.0
    %1419 = vmatpush2.msra.mxu0 0.0
    %1420 = vmatprep.subr.mxu0 0.0
    %1421 = vmatpush2.msra.mxu0 0.0
    %1422 = vmatprep.subr.mxu0 0.0
    %1423 = vmatpush2.msra.mxu0 0.0
    %1424 = vmatprep.subr.mxu0 0.0
    %1425 = vmatpush2.msra.mxu0 0.0
    %1426 = vmatprep.subr.mxu0 0.0
    %1427 = vmatpush2.msra.mxu0 0.0
    %1428 = vmatprep.subr.mxu0 0.0
    %1429 = vmatpush2.msra.mxu0 0.0
    %1430 = vmatprep.subr.mxu0 0.0
    %1431 = vmatpush2.msra.mxu0 0.0
    %1432 = vmatprep.subr.mxu0 0.0
    %1433 = vmatpush2.msra.mxu0 0.0
    %1434 = vmatprep.subr.mxu0 0.0
    %1435 = vmatpush2.msra.mxu0 0.0
    %1436 = vmatprep.subr.mxu0 0.0
    %1437 = vmatpush2.msra.mxu0 0.0
    %1438 = vmatprep.subr.mxu0 0.0
    %1439 = vmatpush2.msra.mxu0 0.0
    %1440 = vmatprep.subr.mxu0 0.0
    %1441 = vmatpush2.msra.mxu0 0.0
    %1442 = vmatprep.subr.mxu0 0.0
    %1443 = vmatpush2.msra.mxu0 0.0
    %1444 = vmatprep.subr.mxu0 0.0
    %1445 = vmatpush2.msra.mxu0 0.0
    %1446 = vmatprep.subr.mxu0 0.0
    %1447 = vmatpush2.msra.mxu0 0.0
    %1448 = vmatprep.mubr.f32.mxu0 0.0
    %1449 = vmatmul.mubr.f32.gmra.mxu0 %v1382
    %v1450 = vpop.f32.mrf.mxu0
    %v1451 = vadd.f32 0.0, %v1450
    %v1452 = vpop.f32.mrf.mxu0
    %1453 = vdwg.mxu0
    %1454 = vst.msk [vmem:[#allocation11] sm:$0xff] %vm757, %v862
    %1455 = vst.msk [vmem:[#allocation11 + $0x8] sm:$0xff] %vm757, %v863
    %1456 = vst.msk [vmem:[#allocation11 + $0x10] sm:$0xff] %vm757, %v864
    %1457 = vst.msk [vmem:[#allocation11 + $0x18] sm:$0xff] %vm757, %v865
    %1458 = vst.msk [vmem:[#allocation11 + $0x20] sm:$0xff] %vm757, %v866
    %1459 = vst.msk [vmem:[#allocation11 + $0x28] sm:$0xff] %vm757, %v867
    %1460 = vst.msk [vmem:[#allocation11 + $0x30] sm:$0xff] %vm757, %v868
    %1461 = vst.msk [vmem:[#allocation11 + $0x38] sm:$0xff] %vm757, %v869
    %1462 = vst.msk [vmem:[#allocation10] sm:$0xff] %vm132, %v940
    %1463 = vst.msk [vmem:[#allocation10 + $0x8] sm:$0xff] %vm132, %v1013
    %1464 = vst.msk [vmem:[#allocation10 + $0x10] sm:$0xff] %vm132, %v1086
    %1465 = vst.msk [vmem:[#allocation10 + $0x18] sm:$0xff] %vm132, %v1159
    %1466 = vst.msk [vmem:[#allocation10 + $0x20] sm:$0xff] %vm132, %v1232
    %1467 = vst.msk [vmem:[#allocation10 + $0x28] sm:$0xff] %vm132, %v1305
    %1468 = vst.msk [vmem:[#allocation10 + $0x30] sm:$0xff] %vm132, %v1378
    %1469 = vst.msk [vmem:[#allocation10 + $0x38] sm:$0xff] %vm132, %v1451
    // Predicated region
    $region34: #{tpu_custom_call.1} parent=1 // pred_check
      _
    $region35: #{tpu_custom_call.1} parent=1 // pred_check_branch
      %1471 = sbr.rel (0) target = $region37
    $region36: #{tpu_custom_call.1} parent=1 // pred_region
      %s1473 = ssub.s32 1024, 1024
      %1474 = vsyncadd [#allocation4], %s1473
      %s1475 = sshll.u32 [#allocation10], 4
      %s1476 = int_to_ptr.vmem [resolvable:$true] %s1475
      %1481 = dma.vmem_to_hbm [thread:$0]  %s1476, 1024, %s4, [#allocation4], 128, 128, 8
    $region37: #{tpu_custom_call.1} parent=1 // pred_fallthru
      _
    // Predicated region
    $region38: #{tpu_custom_call.1} parent=1 // pred_check
      _
    $region39: #{tpu_custom_call.1} parent=1 // pred_check_branch
      %1483 = sbr.rel (0) target = $region41
    $region40: #{tpu_custom_call.1} parent=1 // pred_region
      %s1485 = ssub.s32 1024, 1024
      %1486 = vsyncadd [#allocation12], %s1485
      %s1487 = sshll.u32 [#allocation11], 4
      %s1488 = int_to_ptr.vmem [resolvable:$true] %s1487
      %1493 = dma.vmem_to_hbm [thread:$0]  %s1488, 1024, %s5, [#allocation12], 128, 128, 8
    $region41: #{tpu_custom_call.1} parent=1 // pred_fallthru
      _
    // Predicated region
    $region42: #{tpu_custom_call.1} parent=1 // pred_check
      _
    $region43: #{tpu_custom_call.1} parent=1 // pred_check_branch
      %1495 = sbr.rel (0) target = $region45
    $region44: #{tpu_custom_call.1} parent=1 // pred_region
      %1496 = dma.done [#allocation4], 1024
    $region45: #{tpu_custom_call.1} parent=1 // pred_fallthru
      _
    // Predicated region
    $region46: #{tpu_custom_call.1} parent=1 // pred_check
      _
    $region47: #{tpu_custom_call.1} parent=1 // pred_check_branch
      %1498 = sbr.rel (0) target = $region49
    $region48: #{tpu_custom_call.1} parent=1 // pred_region
      %1499 = dma.done [#allocation12], 1024
    $region49: #{tpu_custom_call.1} parent=1 // pred_fallthru
      _
    %1500 = vsyncpa [#allocation3], 1
    %1501 = vsyncpa [#allocation6], 1
    %1502 = vsyncpa [#allocation9], 1
    %1503 = vsyncpa [#allocation4], 1
    %1504 = vsyncpa [#allocation12], 1

</llo_original>
